<compile_context>
chip_gen: v5e
topology: v5e:2x2
jax: 0.10.0
libtpu: 0.0.40
codegen_flags: <defaults>
</compile_context>

<pallas_src>
import functools
import math

import jax
import jax.numpy as jnp
import numpy as np
from jax import lax
from jax.experimental import pallas as pl
from jax.experimental.pallas import tpu as pltpu

_LANE = 128


def _round_up(n, m):
    return ((n + m - 1) // m) * m


# ---------------------------------------------------------------------------
# Fused kernel: (kxk conv ⊕ folded 1x1) + folded BN + SiLU on one row tile
#
#   x_mid_ref : (1, TH*W, C1P)  bf16   row tile, flattened (h, w) -> h*W + w
#   x_up_ref  : (1, P*W,  C1P)  bf16   P rows directly above (clamped index)
#   x_dn_ref  : (1, P*W,  C1P)  bf16   P rows directly below (clamped index)
#   w_ref     : (K*K, C1P, C2P) bf16   fused weights (1x1 in centre tap, BN in)
#   b_ref     : (1, C2P)        f32    folded BN bias
#   o_ref     : (1, TH*W, C2P)  f32
#   xv_ref    : (2*G + (TH+2P)*W, C1P) f32 scratch: vertically-haloed tile
# ---------------------------------------------------------------------------
def _conv2_fused_kernel(x_mid_ref, x_up_ref, x_dn_ref, w_ref, b_ref, o_ref,
                        xv_ref, *, K, TH, W, C1P, C2P, G):
    P = K // 2
    r = pl.program_id(1)
    n_rt = pl.num_programs(1)
    HW = TH * W
    halo = P * W

    # ---- assemble the vertically-haloed flattened tile in VMEM scratch ----
    # [0:G] guard | [G:G+halo] up | [G+halo:G+halo+HW] mid | dn | [..:..+G] guard
    xv_ref[0:G, :] = jnp.zeros((G, C1P), jnp.float32)
    xv_ref[G + 2 * halo + HW:2 * G + 2 * halo + HW, :] = (
        jnp.zeros((G, C1P), jnp.float32))

    @pl.when(r > 0)                       # interior step: copy neighbour rows
    def _():
        xv_ref[G:G + halo, :] = x_up_ref[0].astype(jnp.float32)

    @pl.when(r == 0)                      # image top: zero "same" padding
    def _():
        xv_ref[G:G + halo, :] = jnp.zeros((halo, C1P), jnp.float32)

    xv_ref[G + halo:G + halo + HW, :] = x_mid_ref[0].astype(jnp.float32)

    @pl.when(r < n_rt - 1)
    def _():
        xv_ref[G + halo + HW:G + 2 * halo + HW, :] = (
            x_dn_ref[0].astype(jnp.float32))

    @pl.when(r == n_rt - 1)               # image bottom: zero "same" padding
    def _():
        xv_ref[G + halo + HW:G + 2 * halo + HW, :] = (
            jnp.zeros((halo, C1P), jnp.float32))

    # Column index of every output pixel: masks the horizontal zero padding
    # (a flattened shift by dx would otherwise wrap across row boundaries).
    col = lax.broadcasted_iota(jnp.int32, (HW, 1), 0) % W

    # ---- K*K shifted bf16 MXU matmuls, f32 accumulation, first-tap init ----
    # The horizontal-pad mask is applied to the (HW, C2P) matmul OUTPUT so the
    # MXU consumes the raw (cast) ref slice (review: cheaper than masking the
    # input; equivalent since zeroing input row i zeroes output row i).
    acc = None
    for dy in range(K):
        for dx in range(K):
            start = G - P + dy * W + dx                      # static offset
            win = xv_ref[start:start + HW, :].astype(jnp.bfloat16)
            t = jnp.dot(win, w_ref[dy * K + dx],
                        preferred_element_type=jnp.float32)  # (HW, C2P) on MXU
            ddx = dx - P
            if ddx < 0:                                      # left zero-pad
                t = jnp.where(col >= -ddx, t, 0.0)
            elif ddx > 0:                                    # right zero-pad
                t = jnp.where(col < W - ddx, t, 0.0)
            acc = t if acc is None else acc + t

    # ---- folded BN bias + SiLU (f32 epilogue; reciprocal on the EUP) ----
    z = acc + b_ref[...]
    y = z * pl.reciprocal(1.0 + jnp.exp(-z), approx=True)
    o_ref[0] = y.astype(o_ref.dtype)


# ---------------------------------------------------------------------------
# Row-tile derivation: largest divisor of H (multiple of P) under a VMEM-ish
# budget cap that still leaves >= 2 row steps per image (no th = H fallback).
# ---------------------------------------------------------------------------
def _derive_row_tile(H, W, c1p, P, row_tile=None):
    if row_tile is None:
        row_tile = max(8 * P, (512 * 1024) // max(1, W * c1p * 2))
    cap = H // 2 if H >= 2 * P else H
    cap = max(P, min(row_tile, cap))
    th = P
    for t in range(P, cap + 1, P):
        if H % t == 0:
            th = t
    return th


# ---------------------------------------------------------------------------
# NHWC-native wrapper (no layout transposes): NHWC f32 in -> (N, H, W, C2P) f32
# ---------------------------------------------------------------------------
def conv2_forward_nhwc(x_nhwc, wf, bias, *, k, row_tile=None):
    N, H, W, C1 = x_nhwc.shape
    KK, C1P, C2P = wf.shape
    assert KK == k * k and k % 2 == 1 and k >= 3
    P = k // 2
    assert H % P == 0 and C1 <= C1P

    # Lane density (only active when C1 < 128): pad input channels to the
    # folded-weight width; cast the MXU/DMA operand to bf16.
    if C1P != C1:
        x_nhwc = jnp.pad(x_nhwc, ((0, 0), (0, 0), (0, 0), (0, C1P - C1)))
    xf = x_nhwc.reshape(N, H * W, C1P).astype(jnp.bfloat16)

    th = _derive_row_tile(H, W, C1P, P, row_tile)
    rb = th // P                       # P-row blocks per row tile
    n_pblk = H // P                    # P-row blocks per image
    g = _round_up(max(P, 8), 8)        # aligned guard rows in the f32 scratch

    mid_map = lambda n, r: (n, r, 0)
    up_map = lambda n, r: (n, jnp.maximum(r * rb - 1, 0), 0)
    dn_map = lambda n, r: (n, jnp.minimum((r + 1) * rb, n_pblk - 1), 0)

    kernel = functools.partial(_conv2_fused_kernel,
                               K=k, TH=th, W=W, C1P=C1P, C2P=C2P, G=g)

    # Per-step VMEM footprint (double-buffered blocks + scratch + accumulator).
    step_bytes = (2 * th * W * C1P * 2            # mid block (bf16), 2 buffers
                  + 2 * 2 * P * W * C1P * 2       # up + dn halo blocks (bf16)
                  + 2 * k * k * C1P * C2P * 2     # fused weights (bf16)
                  + 2 * th * W * C2P * 4          # output block (f32)
                  + ((th + 2 * P) * W + 2 * g) * C1P * 4   # haloed scratch
                  + th * W * C2P * 4)             # f32 accumulator
    vmem_limit = int(min(max(2 * step_bytes, 32 * 2 ** 20), 56 * 2 ** 20))

    cost = pl.CostEstimate(
        flops=2 * N * H * W * k * k * C1P * C2P,
        transcendentals=N * H * W * C2P,
        bytes_accessed=xf.size * 2 + wf.size * 2 + bias.size * 4
        + N * H * W * C2P * 4)

    out = pl.pallas_call(
        kernel,
        out_shape=jax.ShapeDtypeStruct((N, H * W, C2P), jnp.float32),
        grid_spec=pltpu.PrefetchScalarGridSpec(
            num_scalar_prefetch=0,
            grid=(N, H // th),
            in_specs=[
                pl.BlockSpec((1, th * W, C1P), mid_map),
                pl.BlockSpec((1, P * W, C1P), up_map),
                pl.BlockSpec((1, P * W, C1P), dn_map),
                # Grid-invariant blocks (constant index maps): fetched once and
                # kept resident; bf16 halves their VMEM footprint.
                pl.BlockSpec((k * k, C1P, C2P), lambda n, r: (0, 0, 0)),
                pl.BlockSpec((1, C2P), lambda n, r: (0, 0)),
            ],
            out_specs=pl.BlockSpec((1, th * W, C2P), lambda n, r: (n, r, 0)),
            scratch_shapes=[
                pltpu.VMEM(((th + 2 * P) * W + 2 * g, C1P), jnp.float32),
            ],
        ),
        compiler_params=pltpu.CompilerParams(
            dimension_semantics=("parallel", "parallel"),
            vmem_limit_bytes=vmem_limit),
        cost_estimate=cost,
    )(xf, xf, xf, wf, bias)

    return out.reshape(N, H, W, C2P)


def conv2_forward_nchw(x_nchw, wf, bias, *, c2, k, row_tile=None):
    """PyTorch-facing adapter: NCHW float32 in -> NCHW float32 out."""
    y = conv2_forward_nhwc(jnp.transpose(x_nchw, (0, 2, 3, 1)), wf, bias,
                           k=k, row_tile=row_tile)
    return jnp.transpose(y[..., :c2], (0, 3, 1, 2))


# ---------------------------------------------------------------------------
# Parameters (PyTorch layout) + folding into kernel-ready, lane-padded form
# ---------------------------------------------------------------------------
def make_params(key, c1, c2, k):
    """Deterministic synthetic Conv2 parameters (no checkpoint)."""
    ks = jax.random.split(key, 6)
    conv_w = jax.random.normal(ks[0], (c2, c1, k, k), jnp.float32) \
        / math.sqrt(c1 * k * k)                       # conv: kxk, no bias
    cv2_w = jax.random.normal(ks[1], (c2, c1, 1, 1), jnp.float32) \
        / math.sqrt(c1)                               # cv2: 1x1, no bias
    gamma = 1.0 + 0.1 * jax.random.normal(ks[2], (c2,), jnp.float32)
    beta = 0.1 * jax.random.normal(ks[3], (c2,), jnp.float32)
    mean = 0.1 * jax.random.normal(ks[4], (c2,), jnp.float32)
    var = jnp.abs(jax.random.normal(ks[5], (c2,), jnp.float32)) + 0.5
    eps = 1e-5
    return conv_w, cv2_w, gamma, beta, mean, var, eps


def fold_params(conv_w, cv2_w, gamma, beta, mean, var, eps):
    """Fuse cv2 into the centre tap, fold eval-mode BN into weight/bias, pad
    channel dims to the 128-lane width (gated), cast weights to bf16."""
    c2, c1, k, _ = conv_w.shape
    p = k // 2
    w = conv_w.at[:, :, p, p].add(cv2_w[:, :, 0, 0])            # conv(x)+cv2(x)
    scale = gamma / jnp.sqrt(var + eps)
    wf = (jnp.transpose(w, (2, 3, 1, 0)).reshape(k * k, c1, c2)
          * scale[None, None, :])                               # (K*K, C1, C2)
    bias = (beta - mean * scale).reshape(1, c2)
    c1p = _round_up(c1, _LANE)
    c2p = _round_up(c2, _LANE)
    wf = jnp.pad(wf, ((0, 0), (0, c1p - c1), (0, c2p - c2))).astype(jnp.bfloat16)
    bias = jnp.pad(bias, ((0, 0), (0, c2p - c2))).astype(jnp.float32)
    return wf, bias


def conv2_reference(x, conv_w, cv2_w, gamma, beta, mean, var, eps):
    """Pure-JAX f32 reference mirroring PyTorch Conv2.forward (eval-mode BN)."""
    k = conv_w.shape[-1]
    p = k // 2
    dims = ("NCHW", "OIHW", "NCHW")
    y = (lax.conv_general_dilated(x, conv_w, (1, 1), [(p, p), (p, p)],
                                  dimension_numbers=dims)
         + lax.conv_general_dilated(x, cv2_w, (1, 1), [(0, 0), (0, 0)],
                                    dimension_numbers=dims))
    scale = (gamma / jnp.sqrt(var + eps))[None, :, None, None]
    shift = (beta - mean * gamma / jnp.sqrt(var + eps))[None, :, None, None]
    y = y * scale + shift
    return y * jax.nn.sigmoid(y)                                  # SiLU


if __name__ == "__main__":
    # TODO(synk): the wavemix=True branch (DWTForward / Level1Waveblock) is
    # never enabled by Conv2 (its super().__init__ call leaves wavemix falsy)
    # and is not implemented here.
    N, C1, C2, H, W, K = 2, 4, 16, 16, 16, 3

    key = jax.random.PRNGKey(0)
    kx, kp = jax.random.split(key)
    x = jax.random.normal(kx, (N, C1, H, W), jnp.float32)
    params = make_params(kp, C1, C2, K)
    wf, bias = fold_params(*params)

    fwd = jax.jit(functools.partial(conv2_forward_nchw, c2=C2, k=K))
    out = jax.block_until_ready(fwd(x, wf, bias))
    ref = jax.block_until_ready(conv2_reference(x, *params))

    assert out.shape == (N, C2, H, W), out.shape
    # bf16 MXU operands -> compare against the f32 reference with bf16-level
    # tolerance.
    np.testing.assert_allclose(np.asarray(out), np.asarray(ref),
                               rtol=3e-2, atol=3e-2)
    print("KERNEL_OK")
</pallas_src>

<mosaic_0001>
module attributes {stable_mosaic.version = 11 : i64} {
  func.func @_conv2_fused_kernel(%arg0: i32, %arg1: i32, %arg2: memref<1x128x128xbf16, #tpu.memory_space<vmem>>, %arg3: memref<1x16x128xbf16, #tpu.memory_space<vmem>>, %arg4: memref<1x16x128xbf16, #tpu.memory_space<vmem>>, %arg5: memref<9x128x128xbf16, #tpu.memory_space<vmem>>, %arg6: memref<1x128xf32, #tpu.memory_space<vmem>>, %arg7: memref<1x128x128xf32, #tpu.memory_space<vmem>>, %arg8: memref<176x128xf32, #tpu.memory_space<vmem>>) attributes {dimension_semantics = [#tpu.dimension_semantics<parallel>, #tpu.dimension_semantics<parallel>], iteration_bounds = array<i64: 2, 2>, scalar_prefetch = 0 : i64, scratch_operands = 1 : i64, tpu.core_type = #tpu.core_type<tc>, window_params = [{transform_indices = @transform_0, window_bounds = array<i64: 1, 128, 128>}, {transform_indices = @transform_1, window_bounds = array<i64: 1, 16, 128>}, {transform_indices = @transform_2, window_bounds = array<i64: 1, 16, 128>}, {pipeline_mode = #tpu.pipeline_mode<synchronous>, transform_indices = @transform_3, window_bounds = array<i64: 9, 128, 128>}, {pipeline_mode = #tpu.pipeline_mode<synchronous>, transform_indices = @transform_4, window_bounds = array<i64: 1, 128>}, {transform_indices = @transform_5, window_bounds = array<i64: 1, 128, 128>}]} {
    %cst = arith.constant 0.000000e+00 : f32
    %0 = vector.broadcast %cst : f32 to vector<8x128xf32>
    %c0 = arith.constant 0 : index
    %c0_0 = arith.constant 0 : index
    %1 = vector.load %arg8[%c0, %c0_0] : memref<176x128xf32, #tpu.memory_space<vmem>>, vector<8x128xf32>
    tpu.vector_store %arg8[%c0, %c0_0], %0 {strides = array<i32>} : memref<176x128xf32, #tpu.memory_space<vmem>>, vector<8x128xf32>,
    %cst_1 = arith.constant 0.000000e+00 : f32
    %2 = vector.broadcast %cst_1 : f32 to vector<8x128xf32>
    %c168 = arith.constant 168 : index
    %c0_2 = arith.constant 0 : index
    %3 = vector.load %arg8[%c168, %c0_2] : memref<176x128xf32, #tpu.memory_space<vmem>>, vector<8x128xf32>
    tpu.vector_store %arg8[%c168, %c0_2], %2 {strides = array<i32>} : memref<176x128xf32, #tpu.memory_space<vmem>>, vector<8x128xf32>,
    %c0_i32 = arith.constant 0 : i32
    %4 = arith.cmpi sgt, %arg1, %c0_i32 : i32
    %5 = arith.extui %4 : i1 to i32
    %c0_i32_3 = arith.constant 0 : i32
    %6 = arith.cmpi ne, %5, %c0_i32_3 : i32
    scf.if %6 {
      %c0_76 = arith.constant 0 : index
      %c0_77 = arith.constant 0 : index
      %c0_78 = arith.constant 0 : index
      %139 = vector.load %arg3[%c0_76, %c0_77, %c0_78] : memref<1x16x128xbf16, #tpu.memory_space<vmem>>, vector<1x16x128xbf16>
      %140 = vector.shape_cast %139 : vector<1x16x128xbf16> to vector<16x128xbf16>
      %141 = arith.extf %140 : vector<16x128xbf16> to vector<16x128xf32>
      %c8_79 = arith.constant 8 : index
      %c0_80 = arith.constant 0 : index
      %142 = vector.load %arg8[%c8_79, %c0_80] : memref<176x128xf32, #tpu.memory_space<vmem>>, vector<16x128xf32>
      tpu.vector_store %arg8[%c8_79, %c0_80], %141 {strides = array<i32>} : memref<176x128xf32, #tpu.memory_space<vmem>>, vector<16x128xf32>,
    } else {
    }
    %c0_i32_4 = arith.constant 0 : i32
    %7 = arith.cmpi eq, %arg1, %c0_i32_4 : i32
    %8 = arith.extui %7 : i1 to i32
    %c0_i32_5 = arith.constant 0 : i32
    %9 = arith.cmpi ne, %8, %c0_i32_5 : i32
    scf.if %9 {
      %cst_76 = arith.constant 0.000000e+00 : f32
      %139 = vector.broadcast %cst_76 : f32 to vector<16x128xf32>
      %c8_77 = arith.constant 8 : index
      %c0_78 = arith.constant 0 : index
      %140 = vector.load %arg8[%c8_77, %c0_78] : memref<176x128xf32, #tpu.memory_space<vmem>>, vector<16x128xf32>
      tpu.vector_store %arg8[%c8_77, %c0_78], %139 {strides = array<i32>} : memref<176x128xf32, #tpu.memory_space<vmem>>, vector<16x128xf32>,
    } else {
    }
    %c0_6 = arith.constant 0 : index
    %c0_7 = arith.constant 0 : index
    %c0_8 = arith.constant 0 : index
    %10 = vector.load %arg2[%c0_6, %c0_7, %c0_8] : memref<1x128x128xbf16, #tpu.memory_space<vmem>>, vector<1x128x128xbf16>
    %11 = vector.shape_cast %10 : vector<1x128x128xbf16> to vector<128x128xbf16>
    %12 = arith.extf %11 : vector<128x128xbf16> to vector<128x128xf32>
    %c24 = arith.constant 24 : index
    %c0_9 = arith.constant 0 : index
    %13 = vector.load %arg8[%c24, %c0_9] : memref<176x128xf32, #tpu.memory_space<vmem>>, vector<128x128xf32>
    tpu.vector_store %arg8[%c24, %c0_9], %12 {strides = array<i32>} : memref<176x128xf32, #tpu.memory_space<vmem>>, vector<128x128xf32>,
    %c1_i32 = arith.constant 1 : i32
    %14 = arith.cmpi slt, %arg1, %c1_i32 : i32
    %15 = arith.extui %14 : i1 to i32
    %c0_i32_10 = arith.constant 0 : i32
    %16 = arith.cmpi ne, %15, %c0_i32_10 : i32
    scf.if %16 {
      %c0_76 = arith.constant 0 : index
      %c0_77 = arith.constant 0 : index
      %c0_78 = arith.constant 0 : index
      %139 = vector.load %arg4[%c0_76, %c0_77, %c0_78] : memref<1x16x128xbf16, #tpu.memory_space<vmem>>, vector<1x16x128xbf16>
      %140 = vector.shape_cast %139 : vector<1x16x128xbf16> to vector<16x128xbf16>
      %141 = arith.extf %140 : vector<16x128xbf16> to vector<16x128xf32>
      %c152 = arith.constant 152 : index
      %c0_79 = arith.constant 0 : index
      %142 = vector.load %arg8[%c152, %c0_79] : memref<176x128xf32, #tpu.memory_space<vmem>>, vector<16x128xf32>
      tpu.vector_store %arg8[%c152, %c0_79], %141 {strides = array<i32>} : memref<176x128xf32, #tpu.memory_space<vmem>>, vector<16x128xf32>,
    } else {
    }
    %c1_i32_11 = arith.constant 1 : i32
    %17 = arith.cmpi eq, %arg1, %c1_i32_11 : i32
    %18 = arith.extui %17 : i1 to i32
    %c0_i32_12 = arith.constant 0 : i32
    %19 = arith.cmpi ne, %18, %c0_i32_12 : i32
    scf.if %19 {
      %cst_76 = arith.constant 0.000000e+00 : f32
      %139 = vector.broadcast %cst_76 : f32 to vector<16x128xf32>
      %c152 = arith.constant 152 : index
      %c0_77 = arith.constant 0 : index
      %140 = vector.load %arg8[%c152, %c0_77] : memref<176x128xf32, #tpu.memory_space<vmem>>, vector<16x128xf32>
      tpu.vector_store %arg8[%c152, %c0_77], %139 {strides = array<i32>} : memref<176x128xf32, #tpu.memory_space<vmem>>, vector<16x128xf32>,
    } else {
    }
    %20 = tpu.iota {dimensions = array<i32: 0>} : vector<128x1xi32>
    %c16_i32 = arith.constant 16 : i32
    %c0_i32_13 = arith.constant 0 : i32
    %21 = arith.cmpi eq, %c16_i32, %c0_i32_13 : i32
    %c1_i32_14 = arith.constant 1 : i32
    %22 = arith.select %21, %c1_i32_14, %c16_i32 : i32
    %23 = vector.broadcast %22 : i32 to vector<128x1xi32>
    %24 = arith.remsi %20, %23 : vector<128x1xi32>
    %c0_i32_15 = arith.constant 0 : i32
    %25 = vector.broadcast %c0_i32_15 : i32 to vector<128x1xi32>
    %26 = arith.cmpi ne, %24, %25 : vector<128x1xi32>
    %c0_i32_16 = arith.constant 0 : i32
    %27 = vector.broadcast %c0_i32_16 : i32 to vector<128x1xi32>
    %28 = arith.cmpi slt, %24, %27 : vector<128x1xi32>
    %c0_i32_17 = arith.constant 0 : i32
    %29 = arith.cmpi slt, %22, %c0_i32_17 : i32
    %30 = vector.broadcast %29 : i1 to vector<128x1xi1>
    %31 = vector.broadcast %30 : vector<128x1xi1> to vector<128x1xi1>
    %32 = arith.xori %28, %31 : vector<128x1xi1>
    %33 = arith.andi %32, %26 : vector<128x1xi1>
    %34 = vector.broadcast %22 : i32 to vector<128x1xi32>
    %35 = arith.addi %24, %34 : vector<128x1xi32>
    %36 = arith.select %33, %35, %24 : vector<128x1xi1>, vector<128x1xi32>
    %c7 = arith.constant 7 : index
    %c0_18 = arith.constant 0 : index
    %37 = vector.load %arg8[%c7, %c0_18] : memref<176x128xf32, #tpu.memory_space<vmem>>, vector<128x128xf32>
    %38 = arith.truncf %37 : vector<128x128xf32> to vector<128x128xbf16>
    %c0_19 = arith.constant 0 : index
    %c0_20 = arith.constant 0 : index
    %c0_21 = arith.constant 0 : index
    %39 = vector.load %arg5[%c0_19, %c0_20, %c0_21] : memref<9x128x128xbf16, #tpu.memory_space<vmem>>, vector<1x128x128xbf16>
    %40 = vector.shape_cast %39 : vector<1x128x128xbf16> to vector<128x128xbf16>
    %cst_22 = arith.constant dense<0.000000e+00> : vector<128x128xf32>
    %41 = tpu.matmul %38, %40, %cst_22 {dimension_numbers = #tpu.dot_dimension_numbers<[1], [0], [0], [1], [0, 0, 1, 1], [], []>} : vector<128x128xbf16>, vector<128x128xbf16>, vector<128x128xf32> -> vector<128x128xf32>
    %c1_i32_23 = arith.constant 1 : i32
    %42 = vector.broadcast %c1_i32_23 : i32 to vector<128x1xi32>
    %43 = arith.cmpi sge, %36, %42 : vector<128x1xi32>
    %cst_24 = arith.constant 0.000000e+00 : f32
    %44 = vector.shape_cast %43 : vector<128x1xi1> to vector<128x1xi1>
    %45 = vector.broadcast %44 : vector<128x1xi1> to vector<128x128xi1>
    %46 = vector.broadcast %cst_24 : f32 to vector<128x128xf32>
    %47 = arith.select %45, %41, %46 : vector<128x128xi1>, vector<128x128xf32>
    %c8 = arith.constant 8 : index
    %c0_25 = arith.constant 0 : index
    %48 = vector.load %arg8[%c8, %c0_25] : memref<176x128xf32, #tpu.memory_space<vmem>>, vector<128x128xf32>
    %49 = arith.truncf %48 : vector<128x128xf32> to vector<128x128xbf16>
    %c1 = arith.constant 1 : index
    %c0_26 = arith.constant 0 : index
    %c0_27 = arith.constant 0 : index
    %50 = vector.load %arg5[%c1, %c0_26, %c0_27] : memref<9x128x128xbf16, #tpu.memory_space<vmem>>, vector<1x128x128xbf16>
    %51 = vector.shape_cast %50 : vector<1x128x128xbf16> to vector<128x128xbf16>
    %cst_28 = arith.constant dense<0.000000e+00> : vector<128x128xf32>
    %52 = tpu.matmul %49, %51, %cst_28 {dimension_numbers = #tpu.dot_dimension_numbers<[1], [0], [0], [1], [0, 0, 1, 1], [], []>} : vector<128x128xbf16>, vector<128x128xbf16>, vector<128x128xf32> -> vector<128x128xf32>
    %53 = arith.addf %47, %52 : vector<128x128xf32>
    %c9 = arith.constant 9 : index
    %c0_29 = arith.constant 0 : index
    %54 = vector.load %arg8[%c9, %c0_29] : memref<176x128xf32, #tpu.memory_space<vmem>>, vector<128x128xf32>
    %55 = arith.truncf %54 : vector<128x128xf32> to vector<128x128xbf16>
    %c2 = arith.constant 2 : index
    %c0_30 = arith.constant 0 : index
    %c0_31 = arith.constant 0 : index
    %56 = vector.load %arg5[%c2, %c0_30, %c0_31] : memref<9x128x128xbf16, #tpu.memory_space<vmem>>, vector<1x128x128xbf16>
    %57 = vector.shape_cast %56 : vector<1x128x128xbf16> to vector<128x128xbf16>
    %cst_32 = arith.constant dense<0.000000e+00> : vector<128x128xf32>
    %58 = tpu.matmul %55, %57, %cst_32 {dimension_numbers = #tpu.dot_dimension_numbers<[1], [0], [0], [1], [0, 0, 1, 1], [], []>} : vector<128x128xbf16>, vector<128x128xbf16>, vector<128x128xf32> -> vector<128x128xf32>
    %c15_i32 = arith.constant 15 : i32
    %59 = vector.broadcast %c15_i32 : i32 to vector<128x1xi32>
    %60 = arith.cmpi slt, %36, %59 : vector<128x1xi32>
    %cst_33 = arith.constant 0.000000e+00 : f32
    %61 = vector.shape_cast %60 : vector<128x1xi1> to vector<128x1xi1>
    %62 = vector.broadcast %61 : vector<128x1xi1> to vector<128x128xi1>
    %63 = vector.broadcast %cst_33 : f32 to vector<128x128xf32>
    %64 = arith.select %62, %58, %63 : vector<128x128xi1>, vector<128x128xf32>
    %65 = arith.addf %53, %64 : vector<128x128xf32>
    %c23 = arith.constant 23 : index
    %c0_34 = arith.constant 0 : index
    %66 = vector.load %arg8[%c23, %c0_34] : memref<176x128xf32, #tpu.memory_space<vmem>>, vector<128x128xf32>
    %67 = arith.truncf %66 : vector<128x128xf32> to vector<128x128xbf16>
    %c3 = arith.constant 3 : index
    %c0_35 = arith.constant 0 : index
    %c0_36 = arith.constant 0 : index
    %68 = vector.load %arg5[%c3, %c0_35, %c0_36] : memref<9x128x128xbf16, #tpu.memory_space<vmem>>, vector<1x128x128xbf16>
    %69 = vector.shape_cast %68 : vector<1x128x128xbf16> to vector<128x128xbf16>
    %cst_37 = arith.constant dense<0.000000e+00> : vector<128x128xf32>
    %70 = tpu.matmul %67, %69, %cst_37 {dimension_numbers = #tpu.dot_dimension_numbers<[1], [0], [0], [1], [0, 0, 1, 1], [], []>} : vector<128x128xbf16>, vector<128x128xbf16>, vector<128x128xf32> -> vector<128x128xf32>
    %c1_i32_38 = arith.constant 1 : i32
    %71 = vector.broadcast %c1_i32_38 : i32 to vector<128x1xi32>
    %72 = arith.cmpi sge, %36, %71 : vector<128x1xi32>
    %cst_39 = arith.constant 0.000000e+00 : f32
    %73 = vector.shape_cast %72 : vector<128x1xi1> to vector<128x1xi1>
    %74 = vector.broadcast %73 : vector<128x1xi1> to vector<128x128xi1>
    %75 = vector.broadcast %cst_39 : f32 to vector<128x128xf32>
    %76 = arith.select %74, %70, %75 : vector<128x128xi1>, vector<128x128xf32>
    %77 = arith.addf %65, %76 : vector<128x128xf32>
    %c24_40 = arith.constant 24 : index
    %c0_41 = arith.constant 0 : index
    %78 = vector.load %arg8[%c24_40, %c0_41] : memref<176x128xf32, #tpu.memory_space<vmem>>, vector<128x128xf32>
    %79 = arith.truncf %78 : vector<128x128xf32> to vector<128x128xbf16>
    %c4 = arith.constant 4 : index
    %c0_42 = arith.constant 0 : index
    %c0_43 = arith.constant 0 : index
    %80 = vector.load %arg5[%c4, %c0_42, %c0_43] : memref<9x128x128xbf16, #tpu.memory_space<vmem>>, vector<1x128x128xbf16>
    %81 = vector.shape_cast %80 : vector<1x128x128xbf16> to vector<128x128xbf16>
    %cst_44 = arith.constant dense<0.000000e+00> : vector<128x128xf32>
    %82 = tpu.matmul %79, %81, %cst_44 {dimension_numbers = #tpu.dot_dimension_numbers<[1], [0], [0], [1], [0, 0, 1, 1], [], []>} : vector<128x128xbf16>, vector<128x128xbf16>, vector<128x128xf32> -> vector<128x128xf32>
    %83 = arith.addf %77, %82 : vector<128x128xf32>
    %c25 = arith.constant 25 : index
    %c0_45 = arith.constant 0 : index
    %84 = vector.load %arg8[%c25, %c0_45] : memref<176x128xf32, #tpu.memory_space<vmem>>, vector<128x128xf32>
    %85 = arith.truncf %84 : vector<128x128xf32> to vector<128x128xbf16>
    %c5 = arith.constant 5 : index
    %c0_46 = arith.constant 0 : index
    %c0_47 = arith.constant 0 : index
    %86 = vector.load %arg5[%c5, %c0_46, %c0_47] : memref<9x128x128xbf16, #tpu.memory_space<vmem>>, vector<1x128x128xbf16>
    %87 = vector.shape_cast %86 : vector<1x128x128xbf16> to vector<128x128xbf16>
    %cst_48 = arith.constant dense<0.000000e+00> : vector<128x128xf32>
    %88 = tpu.matmul %85, %87, %cst_48 {dimension_numbers = #tpu.dot_dimension_numbers<[1], [0], [0], [1], [0, 0, 1, 1], [], []>} : vector<128x128xbf16>, vector<128x128xbf16>, vector<128x128xf32> -> vector<128x128xf32>
    %c15_i32_49 = arith.constant 15 : i32
    %89 = vector.broadcast %c15_i32_49 : i32 to vector<128x1xi32>
    %90 = arith.cmpi slt, %36, %89 : vector<128x1xi32>
    %cst_50 = arith.constant 0.000000e+00 : f32
    %91 = vector.shape_cast %90 : vector<128x1xi1> to vector<128x1xi1>
    %92 = vector.broadcast %91 : vector<128x1xi1> to vector<128x128xi1>
    %93 = vector.broadcast %cst_50 : f32 to vector<128x128xf32>
    %94 = arith.select %92, %88, %93 : vector<128x128xi1>, vector<128x128xf32>
    %95 = arith.addf %83, %94 : vector<128x128xf32>
    %c39 = arith.constant 39 : index
    %c0_51 = arith.constant 0 : index
    %96 = vector.load %arg8[%c39, %c0_51] : memref<176x128xf32, #tpu.memory_space<vmem>>, vector<128x128xf32>
    %97 = arith.truncf %96 : vector<128x128xf32> to vector<128x128xbf16>
    %c6 = arith.constant 6 : index
    %c0_52 = arith.constant 0 : index
    %c0_53 = arith.constant 0 : index
    %98 = vector.load %arg5[%c6, %c0_52, %c0_53] : memref<9x128x128xbf16, #tpu.memory_space<vmem>>, vector<1x128x128xbf16>
    %99 = vector.shape_cast %98 : vector<1x128x128xbf16> to vector<128x128xbf16>
    %cst_54 = arith.constant dense<0.000000e+00> : vector<128x128xf32>
    %100 = tpu.matmul %97, %99, %cst_54 {dimension_numbers = #tpu.dot_dimension_numbers<[1], [0], [0], [1], [0, 0, 1, 1], [], []>} : vector<128x128xbf16>, vector<128x128xbf16>, vector<128x128xf32> -> vector<128x128xf32>
    %c1_i32_55 = arith.constant 1 : i32
    %101 = vector.broadcast %c1_i32_55 : i32 to vector<128x1xi32>
    %102 = arith.cmpi sge, %36, %101 : vector<128x1xi32>
    %cst_56 = arith.constant 0.000000e+00 : f32
    %103 = vector.shape_cast %102 : vector<128x1xi1> to vector<128x1xi1>
    %104 = vector.broadcast %103 : vector<128x1xi1> to vector<128x128xi1>
    %105 = vector.broadcast %cst_56 : f32 to vector<128x128xf32>
    %106 = arith.select %104, %100, %105 : vector<128x128xi1>, vector<128x128xf32>
    %107 = arith.addf %95, %106 : vector<128x128xf32>
    %c40 = arith.constant 40 : index
    %c0_57 = arith.constant 0 : index
    %108 = vector.load %arg8[%c40, %c0_57] : memref<176x128xf32, #tpu.memory_space<vmem>>, vector<128x128xf32>
    %109 = arith.truncf %108 : vector<128x128xf32> to vector<128x128xbf16>
    %c7_58 = arith.constant 7 : index
    %c0_59 = arith.constant 0 : index
    %c0_60 = arith.constant 0 : index
    %110 = vector.load %arg5[%c7_58, %c0_59, %c0_60] : memref<9x128x128xbf16, #tpu.memory_space<vmem>>, vector<1x128x128xbf16>
    %111 = vector.shape_cast %110 : vector<1x128x128xbf16> to vector<128x128xbf16>
    %cst_61 = arith.constant dense<0.000000e+00> : vector<128x128xf32>
    %112 = tpu.matmul %109, %111, %cst_61 {dimension_numbers = #tpu.dot_dimension_numbers<[1], [0], [0], [1], [0, 0, 1, 1], [], []>} : vector<128x128xbf16>, vector<128x128xbf16>, vector<128x128xf32> -> vector<128x128xf32>
    %113 = arith.addf %107, %112 : vector<128x128xf32>
    %c41 = arith.constant 41 : index
    %c0_62 = arith.constant 0 : index
    %114 = vector.load %arg8[%c41, %c0_62] : memref<176x128xf32, #tpu.memory_space<vmem>>, vector<128x128xf32>
    %115 = arith.truncf %114 : vector<128x128xf32> to vector<128x128xbf16>
    %c8_63 = arith.constant 8 : index
    %c0_64 = arith.constant 0 : index
    %c0_65 = arith.constant 0 : index
    %116 = vector.load %arg5[%c8_63, %c0_64, %c0_65] : memref<9x128x128xbf16, #tpu.memory_space<vmem>>, vector<1x128x128xbf16>
    %117 = vector.shape_cast %116 : vector<1x128x128xbf16> to vector<128x128xbf16>
    %cst_66 = arith.constant dense<0.000000e+00> : vector<128x128xf32>
    %118 = tpu.matmul %115, %117, %cst_66 {dimension_numbers = #tpu.dot_dimension_numbers<[1], [0], [0], [1], [0, 0, 1, 1], [], []>} : vector<128x128xbf16>, vector<128x128xbf16>, vector<128x128xf32> -> vector<128x128xf32>
    %c15_i32_67 = arith.constant 15 : i32
    %119 = vector.broadcast %c15_i32_67 : i32 to vector<128x1xi32>
    %120 = arith.cmpi slt, %36, %119 : vector<128x1xi32>
    %cst_68 = arith.constant 0.000000e+00 : f32
    %121 = vector.shape_cast %120 : vector<128x1xi1> to vector<128x1xi1>
    %122 = vector.broadcast %121 : vector<128x1xi1> to vector<128x128xi1>
    %123 = vector.broadcast %cst_68 : f32 to vector<128x128xf32>
    %124 = arith.select %122, %118, %123 : vector<128x128xi1>, vector<128x128xf32>
    %125 = arith.addf %113, %124 : vector<128x128xf32>
    %c0_69 = arith.constant 0 : index
    %c0_70 = arith.constant 0 : index
    %126 = vector.load %arg6[%c0_69, %c0_70] : memref<1x128xf32, #tpu.memory_space<vmem>>, vector<1x128xf32>
    %127 = vector.broadcast %126 : vector<1x128xf32> to vector<128x128xf32>
    %128 = arith.addf %125, %127 : vector<128x128xf32>
    %cst_71 = arith.constant 0.000000e+00 : f32
    %129 = vector.broadcast %cst_71 : f32 to vector<128x128xf32>
    %130 = arith.subf %129, %128 : vector<128x128xf32>
    %131 = math.exp %130 : vector<128x128xf32>
    %cst_72 = arith.constant 1.000000e+00 : f32
    %132 = vector.broadcast %cst_72 : f32 to vector<128x128xf32>
    %133 = arith.addf %132, %131 : vector<128x128xf32>
    %134 = tpu.reciprocal %133 {approx = true} : vector<128x128xf32> -> vector<128x128xf32>
    %135 = arith.mulf %128, %134 : vector<128x128xf32>
    %c0_73 = arith.constant 0 : index
    %c0_74 = arith.constant 0 : index
    %c0_75 = arith.constant 0 : index
    %136 = vector.load %arg7[%c0_73, %c0_74, %c0_75] : memref<1x128x128xf32, #tpu.memory_space<vmem>>, vector<1x128x128xf32>
    %137 = vector.shape_cast %136 : vector<1x128x128xf32> to vector<128x128xf32>
    %138 = vector.shape_cast %135 : vector<128x128xf32> to vector<1x128x128xf32>
    tpu.vector_store %arg7[%c0_73, %c0_74, %c0_75], %138 {strides = array<i32>} : memref<1x128x128xf32, #tpu.memory_space<vmem>>, vector<1x128x128xf32>,
    return
  }
  func.func @transform_0(%arg0: i32, %arg1: i32) -> (i32, i32, i32) {
    %c0_i32 = arith.constant 0 : i32
    %c0_i32_0 = arith.constant 0 : i32
    return %arg0, %arg1, %c0_i32 : i32, i32, i32
  }
  func.func @transform_1(%arg0: i32, %arg1: i32) -> (i32, i32, i32) {
    %c8_i32 = arith.constant 8 : i32
    %0 = arith.muli %arg1, %c8_i32 : i32
    %c1_i32 = arith.constant 1 : i32
    %1 = arith.subi %0, %c1_i32 : i32
    %c0_i32 = arith.constant 0 : i32
    %2 = arith.maxsi %1, %c0_i32 : i32
    %c0_i32_0 = arith.constant 0 : i32
    %c0_i32_1 = arith.constant 0 : i32
    return %arg0, %2, %c0_i32_0 : i32, i32, i32
  }
  func.func @transform_2(%arg0: i32, %arg1: i32) -> (i32, i32, i32) {
    %c1_i32 = arith.constant 1 : i32
    %0 = arith.addi %arg1, %c1_i32 : i32
    %c8_i32 = arith.constant 8 : i32
    %1 = arith.muli %0, %c8_i32 : i32
    %c15_i32 = arith.constant 15 : i32
    %2 = arith.minsi %1, %c15_i32 : i32
    %c0_i32 = arith.constant 0 : i32
    %c0_i32_0 = arith.constant 0 : i32
    return %arg0, %2, %c0_i32 : i32, i32, i32
  }
  func.func @transform_3(%arg0: i32, %arg1: i32) -> (i32, i32, i32) {
    %c0_i32 = arith.constant 0 : i32
    %c0_i32_0 = arith.constant 0 : i32
    %c0_i32_1 = arith.constant 0 : i32
    %c0_i32_2 = arith.constant 0 : i32
    return %c0_i32, %c0_i32_0, %c0_i32_1 : i32, i32, i32
  }
  func.func @transform_4(%arg0: i32, %arg1: i32) -> (i32, i32) {
    %c0_i32 = arith.constant 0 : i32
    %c0_i32_0 = arith.constant 0 : i32
    %c0_i32_1 = arith.constant 0 : i32
    return %c0_i32, %c0_i32_0 : i32, i32
  }
  func.func @transform_5(%arg0: i32, %arg1: i32) -> (i32, i32, i32) {
    %c0_i32 = arith.constant 0 : i32
    %c0_i32_0 = arith.constant 0 : i32
    return %arg0, %arg1, %c0_i32 : i32, i32, i32
  }
}

</mosaic_0001>

<llo_original>
// kernel: conv2_forward_nchw.1
$region0: #{conv2_forward_nchw.1}
  #allocation0 [shape = 'u32[]', space=smem, size = 0x4, offset = 0x4, fixed_abs, tag = 'smem constant byte address 0x4 - core index']
  #allocation1 [shape = 'u32[72,128]{1,0:T(1,128)}', space=vmem, size = 0x9000, scoped, tag = 'internal scratch']
  #allocation2 [shape = 'f32[176,128]{1,0:T(8,128)}', space=vmem, size = 0x16000, scoped, tag = 'scratch operand']
  %s0 = inlined_call_operand.vmem [shape: bf16[2,256,128], index: 0, kind: input, shape index: {}, may-alias: {0,1,2}]
  %s1 = inlined_call_operand.vmem [shape: bf16[2,256,128], index: 1, kind: input, shape index: {}, may-alias: {0,1,2}]
  %s2 = inlined_call_operand.vmem [shape: bf16[2,256,128], index: 2, kind: input, shape index: {}, may-alias: {0,1,2}]
  %s3 = inlined_call_operand.vmem [shape: bf16[9,128,128], index: 3, kind: input, shape index: {}]
  %s4 = inlined_call_operand.vmem [shape: f32[1,128], index: 4, kind: input, shape index: {}]
  %s5 = inlined_call_operand.vmem [shape: f32[2,256,128], index: 5, kind: output, shape index: {}]
  %s6 = sld [smem:[#allocation0]]
  $region69: #{conv2_forward_nchw.1} parent=0
    _
  %s8 = ssub.s32 1, %s6
  %s9 = scalar_select 0, %s8, %s6
  loop: start=0, step=1, limit=6
  $region2: #{conv2_forward_nchw.1} parent=0 // loop_pre_header
    _
  $region3: #{conv2_forward_nchw.1} parent=0 // loop_header
    %s11 = sphi 0, %s15
    %p12 = scmp.ge.s32.totalorder %s11, 6
    %s18 = sphi 0, %s30
    %s19 = sphi 0, %s26
    %s20 = sphi 0, %s18
    %s21 = sphi 0, %s19
    %s22 = sphi 0, %s20
    %s23 = sphi 0, %s21
    %s35 = sphi 0, %s37
    %s38 = sphi 0, %s35
    %s39 = sphi 0, %s38
    %s55 = sphi 0, %s39
    %s71 = sphi 0, %s73
    %s74 = sphi 0, %s71
    %s75 = sphi 0, %s74
    %s91 = sphi 0, %s75
    %s107 = sphi 0, %s109
    %s110 = sphi 0, %s107
    %s111 = sphi 0, %s110
    %s127 = sphi 0, %s111
    %s131 = sphi 0, %s131
    %s133 = sphi 0, %s131
    %s134 = sphi 0, %s133
    %s148 = sphi 0, %s134
    %s152 = sphi 0, %s152
    %s154 = sphi 0, %s152
    %s155 = sphi 0, %s154
    %s169 = sphi 0, %s155
    %s177 = sphi 0, %s179
    %s180 = sphi 0, %s177
    %s181 = sphi 0, %s180
    %s197 = sphi 0, %s181
  $region4: #{conv2_forward_nchw.1} parent=0 // loop_header_branch
    %14 = sbr.rel (%p12) target = $region8
  $region5: #{conv2_forward_nchw.1} parent=0 // loop_body
    %s16 = ssub.s32 %s11, 1
    %s17 = ssub.s32 %s11, 2
    %s24 = sadd.s32 1, %s19
    %p25 = scmp.ge.s32.totalorder %s24, 2
    %s26 = scalar_select %p25, 0, %s24
    %s27 = sadd.s32 1, %s18
    %s28 = scalar_select %p25, %s27, %s18
    %p29 = scmp.ge.s32.totalorder %s28, 2
    %s30 = scalar_select %p29, 0, %s28
    %s31 = ssub.s32 %s18, %s30
    %s32 = ssub.s32 %s19, %s26
    %s33 = sor.u32 %s31, %s32
    %p34 = scmp.eq.s32.totalorder %s33, 0
    %s36 = sadd.s32 %s35, 1
    %s37 = scalar_select %p34, %s35, %s36
    %p40 = pneg %p34
    %p41 = scmp.eq.s32.totalorder %s11, 3
    %p42 = por %p40, %p41
    %p43 = scmp.ne.s32.totalorder %s35, %s38
    %p44 = scmp.eq.s32.totalorder %s11, 0
    %p45 = por %p43, %p44
    %p46 = scmp.ne.s32.totalorder %s35, %s38
    %p47 = scmp.eq.s32.totalorder %s16, 3
    %p48 = por %p46, %p47
    %p49 = scmp.ne.s32.totalorder %s38, %s39
    %p50 = scmp.eq.s32.totalorder %s16, 0
    %p51 = por %p49, %p50
    %p52 = scmp.ne.s32.totalorder %s38, %s39
    %p53 = scmp.eq.s32.totalorder %s17, 3
    %p54 = por %p52, %p53
    %p56 = scmp.ne.s32.totalorder %s39, %s55
    %p57 = scmp.eq.s32.totalorder %s17, 0
    %p58 = por %p56, %p57
    %s59 = smul.u32 %s19, 8
    %s60 = ssub.s32 %s59, 1
    %p61 = scmp.gt.s32.totalorder %s60, 0
    %s62 = scalar_select %p61, %s60, 0
    %s63 = smul.u32 %s26, 8
    %s64 = ssub.s32 %s63, 1
    %p65 = scmp.gt.s32.totalorder %s64, 0
    %s66 = scalar_select %p65, %s64, 0
    %s67 = ssub.s32 %s18, %s30
    %s68 = ssub.s32 %s62, %s66
    %s69 = sor.u32 %s67, %s68
    %p70 = scmp.eq.s32.totalorder %s69, 0
    %s72 = sadd.s32 %s71, 1
    %s73 = scalar_select %p70, %s71, %s72
    %p76 = pneg %p70
    %p77 = scmp.eq.s32.totalorder %s11, 3
    %p78 = por %p76, %p77
    %p79 = scmp.ne.s32.totalorder %s71, %s74
    %p80 = scmp.eq.s32.totalorder %s11, 0
    %p81 = por %p79, %p80
    %p82 = scmp.ne.s32.totalorder %s71, %s74
    %p83 = scmp.eq.s32.totalorder %s16, 3
    %p84 = por %p82, %p83
    %p85 = scmp.ne.s32.totalorder %s74, %s75
    %p86 = scmp.eq.s32.totalorder %s16, 0
    %p87 = por %p85, %p86
    %p88 = scmp.ne.s32.totalorder %s74, %s75
    %p89 = scmp.eq.s32.totalorder %s17, 3
    %p90 = por %p88, %p89
    %p92 = scmp.ne.s32.totalorder %s75, %s91
    %p93 = scmp.eq.s32.totalorder %s17, 0
    %p94 = por %p92, %p93
    %s95 = sadd.s32 %s19, 1
    %s96 = smul.u32 %s95, 8
    %p97 = scmp.lt.s32.totalorder %s96, 15
    %s98 = scalar_select %p97, %s96, 15
    %s99 = sadd.s32 %s26, 1
    %s100 = smul.u32 %s99, 8
    %p101 = scmp.lt.s32.totalorder %s100, 15
    %s102 = scalar_select %p101, %s100, 15
    %s103 = ssub.s32 %s18, %s30
    %s104 = ssub.s32 %s98, %s102
    %s105 = sor.u32 %s103, %s104
    %p106 = scmp.eq.s32.totalorder %s105, 0
    %s108 = sadd.s32 %s107, 1
    %s109 = scalar_select %p106, %s107, %s108
    %p112 = pneg %p106
    %p113 = scmp.eq.s32.totalorder %s11, 3
    %p114 = por %p112, %p113
    %p115 = scmp.ne.s32.totalorder %s107, %s110
    %p116 = scmp.eq.s32.totalorder %s11, 0
    %p117 = por %p115, %p116
    %p118 = scmp.ne.s32.totalorder %s107, %s110
    %p119 = scmp.eq.s32.totalorder %s16, 3
    %p120 = por %p118, %p119
    %p121 = scmp.ne.s32.totalorder %s110, %s111
    %p122 = scmp.eq.s32.totalorder %s16, 0
    %p123 = por %p121, %p122
    %p124 = scmp.ne.s32.totalorder %s110, %s111
    %p125 = scmp.eq.s32.totalorder %s17, 3
    %p126 = por %p124, %p125
    %p128 = scmp.ne.s32.totalorder %s111, %s127
    %p129 = scmp.eq.s32.totalorder %s17, 0
    %p130 = por %p128, %p129
    %s132 = sadd.s32 %s131, 1
    %p135 = scmp.eq.s32.totalorder %s11, 3
    %p136 = scmp.ne.s32.totalorder %s131, %s133
    %p137 = scmp.eq.s32.totalorder %s11, 0
    %p138 = por %p136, %p137
    %p139 = scmp.ne.s32.totalorder %s131, %s133
    %p140 = scmp.eq.s32.totalorder %s16, 3
    %p141 = por %p139, %p140
    %p142 = scmp.ne.s32.totalorder %s133, %s134
    %p143 = scmp.eq.s32.totalorder %s16, 0
    %p144 = por %p142, %p143
    %p145 = scmp.ne.s32.totalorder %s133, %s134
    %p146 = scmp.eq.s32.totalorder %s17, 3
    %p147 = por %p145, %p146
    %p149 = scmp.ne.s32.totalorder %s134, %s148
    %p150 = scmp.eq.s32.totalorder %s17, 0
    %p151 = por %p149, %p150
    %s153 = sadd.s32 %s152, 1
    %p156 = scmp.eq.s32.totalorder %s11, 3
    %p157 = scmp.ne.s32.totalorder %s152, %s154
    %p158 = scmp.eq.s32.totalorder %s11, 0
    %p159 = por %p157, %p158
    %p160 = scmp.ne.s32.totalorder %s152, %s154
    %p161 = scmp.eq.s32.totalorder %s16, 3
    %p162 = por %p160, %p161
    %p163 = scmp.ne.s32.totalorder %s154, %s155
    %p164 = scmp.eq.s32.totalorder %s16, 0
    %p165 = por %p163, %p164
    %p166 = scmp.ne.s32.totalorder %s154, %s155
    %p167 = scmp.eq.s32.totalorder %s17, 3
    %p168 = por %p166, %p167
    %p170 = scmp.ne.s32.totalorder %s155, %s169
    %p171 = scmp.eq.s32.totalorder %s17, 0
    %p172 = por %p170, %p171
    %s173 = ssub.s32 %s18, %s30
    %s174 = ssub.s32 %s19, %s26
    %s175 = sor.u32 %s173, %s174
    %p176 = scmp.eq.s32.totalorder %s175, 0
    %s178 = sadd.s32 %s177, 1
    %s179 = scalar_select %p176, %s177, %s178
    %p182 = pneg %p176
    %p183 = scmp.eq.s32.totalorder %s11, 3
    %p184 = por %p182, %p183
    %p185 = scmp.ne.s32.totalorder %s177, %s180
    %p186 = scmp.eq.s32.totalorder %s11, 0
    %p187 = por %p185, %p186
    %p188 = scmp.ne.s32.totalorder %s177, %s180
    %p189 = scmp.eq.s32.totalorder %s16, 3
    %p190 = por %p188, %p189
    %p191 = scmp.ne.s32.totalorder %s180, %s181
    %p192 = scmp.eq.s32.totalorder %s16, 0
    %p193 = por %p191, %p192
    %p194 = scmp.ne.s32.totalorder %s180, %s181
    %p195 = scmp.eq.s32.totalorder %s17, 3
    %p196 = por %p194, %p195
    %p198 = scmp.ne.s32.totalorder %s181, %s197
    %p199 = scmp.eq.s32.totalorder %s17, 0
    %p200 = por %p198, %p199
    %p201 = scmp.le.s32.totalorder 1, %s11
    %p202 = scmp.lt.s32.totalorder %s11, 5
    %p203 = pnand %p201, %p202
    %p204 = pneg %p203
    // Predicated region
    $region9: #{conv2_forward_nchw.1} parent=5 // pred_check
      _
    $region10: #{conv2_forward_nchw.1} parent=5 // pred_check_branch
      %206 = sbr.rel (%p203) target = $region12
    $region11: #{conv2_forward_nchw.1} parent=5 // pred_region
      %s207 = ssub.s32 %s11, 1
      // Predicated region
      $region13: #{conv2_forward_nchw.1} parent=11 // pred_check
        %p208 = pneg %p144
      $region14: #{conv2_forward_nchw.1} parent=11 // pred_check_branch
        %210 = sbr.rel (%p208) target = $region16
      $region15: #{conv2_forward_nchw.1} parent=11 // pred_region
        _
      $region16: #{conv2_forward_nchw.1} parent=11 // pred_fallthru
        _
      // Predicated region
      $region17: #{conv2_forward_nchw.1} parent=11 // pred_check
        %p211 = pneg %p165
      $region18: #{conv2_forward_nchw.1} parent=11 // pred_check_branch
        %213 = sbr.rel (%p211) target = $region20
      $region19: #{conv2_forward_nchw.1} parent=11 // pred_region
        _
      $region20: #{conv2_forward_nchw.1} parent=11 // pred_fallthru
        _
    $region12: #{conv2_forward_nchw.1} parent=5 // pred_fallthru
      _
    %p214 = scmp.lt.s32.totalorder %s11, 4
    // Predicated region
    $region21: #{conv2_forward_nchw.1} parent=5 // pred_check
      %p215 = pneg %p214
    $region22: #{conv2_forward_nchw.1} parent=5 // pred_check_branch
      %217 = sbr.rel (%p215) target = $region24
    $region23: #{conv2_forward_nchw.1} parent=5 // pred_region
      // Predicated region
      $region25: #{conv2_forward_nchw.1} parent=23 // pred_check
        %p218 = pneg %p45
      $region26: #{conv2_forward_nchw.1} parent=23 // pred_check_branch
        %220 = sbr.rel (%p218) target = $region28
      $region27: #{conv2_forward_nchw.1} parent=23 // pred_region
        %s221 = smul.u32 16, %s19
        %p222 = scmp.lt.s32.totalorder %s18, 1
        %s223 = scalar_select %p222, %s18, 1
        %p224 = scmp.lt.s32.totalorder %s221, 31
        %s225 = scalar_select %p224, %s221, 31
        %s226 = smul.addr %s223, 32
        %s227 = sadd.s32 %s225, %s226
        %s228 = smul.addr %s227, 4
        %s229 = scalar_lea.vmem %s0, %s228
        %s230 = smul.u32 16, %s19
      $region28: #{conv2_forward_nchw.1} parent=23 // pred_fallthru
        _
      // Predicated region
      $region29: #{conv2_forward_nchw.1} parent=23 // pred_check
        %p231 = pneg %p81
      $region30: #{conv2_forward_nchw.1} parent=23 // pred_check_branch
        %233 = sbr.rel (%p231) target = $region32
      $region31: #{conv2_forward_nchw.1} parent=23 // pred_region
        %s234 = smul.u32 %s19, 8
        %s235 = ssub.s32 %s234, 1
        %p236 = scmp.gt.s32.totalorder %s235, 0
        %s237 = scalar_select %p236, %s235, 0
        %s238 = smul.u32 2, %s237
        %p239 = scmp.lt.s32.totalorder %s18, 1
        %s240 = scalar_select %p239, %s18, 1
        %p241 = scmp.lt.s32.totalorder %s238, 31
        %s242 = scalar_select %p241, %s238, 31
        %s243 = smul.addr %s240, 32
        %s244 = sadd.s32 %s242, %s243
        %s245 = smul.addr %s244, 4
        %s246 = scalar_lea.vmem %s1, %s245
        %s247 = smul.u32 %s19, 8
        %s248 = ssub.s32 %s247, 1
        %p249 = scmp.gt.s32.totalorder %s248, 0
        %s250 = scalar_select %p249, %s248, 0
        %s251 = smul.u32 2, %s250
      $region32: #{conv2_forward_nchw.1} parent=23 // pred_fallthru
        _
      // Predicated region
      $region33: #{conv2_forward_nchw.1} parent=23 // pred_check
        %p252 = pneg %p117
      $region34: #{conv2_forward_nchw.1} parent=23 // pred_check_branch
        %254 = sbr.rel (%p252) target = $region36
      $region35: #{conv2_forward_nchw.1} parent=23 // pred_region
        %s255 = sadd.s32 %s19, 1
        %s256 = smul.u32 %s255, 8
        %p257 = scmp.lt.s32.totalorder %s256, 15
        %s258 = scalar_select %p257, %s256, 15
        %s259 = smul.u32 2, %s258
        %p260 = scmp.lt.s32.totalorder %s18, 1
        %s261 = scalar_select %p260, %s18, 1
        %p262 = scmp.lt.s32.totalorder %s259, 31
        %s263 = scalar_select %p262, %s259, 31
        %s264 = smul.addr %s261, 32
        %s265 = sadd.s32 %s263, %s264
        %s266 = smul.addr %s265, 4
        %s267 = scalar_lea.vmem %s2, %s266
        %s268 = sadd.s32 %s19, 1
        %s269 = smul.u32 %s268, 8
        %p270 = scmp.lt.s32.totalorder %s269, 15
        %s271 = scalar_select %p270, %s269, 15
        %s272 = smul.u32 2, %s271
      $region36: #{conv2_forward_nchw.1} parent=23 // pred_fallthru
        _
    $region24: #{conv2_forward_nchw.1} parent=5 // pred_fallthru
      _
    %p273 = scmp.le.s32.totalorder 1, %s11
    %p274 = scmp.lt.s32.totalorder %s11, 5
    %p275 = pnand %p273, %p274
    %p276 = pneg %p275
    // Predicated region
    $region37: #{conv2_forward_nchw.1} parent=5 // pred_check
      _
    $region38: #{conv2_forward_nchw.1} parent=5 // pred_check_branch
      %278 = sbr.rel (%p275) target = $region40
    $region39: #{conv2_forward_nchw.1} parent=5 // pred_region
      %s279 = ssub.s32 %s11, 1
      %s280 = smul.u32 16, %s21
      %p281 = scmp.lt.s32.totalorder %s20, 1
      %s282 = scalar_select %p281, %s20, 1
      %p283 = scmp.lt.s32.totalorder %s280, 31
      %s284 = scalar_select %p283, %s280, 31
      %s285 = smul.addr %s282, 32
      %s286 = sadd.s32 %s284, %s285
      %s287 = smul.addr %s286, 4
      %s288 = scalar_lea.vmem %s0, %s287
      %p289 = pneg %p51
      %p290 = pneg %p48
      %s291 = smul.u32 %s21, 8
      %s292 = ssub.s32 %s291, 1
      %p293 = scmp.gt.s32.totalorder %s292, 0
      %s294 = scalar_select %p293, %s292, 0
      %s295 = smul.u32 2, %s294
      %p296 = scmp.lt.s32.totalorder %s20, 1
      %s297 = scalar_select %p296, %s20, 1
      %p298 = scmp.lt.s32.totalorder %s295, 31
      %s299 = scalar_select %p298, %s295, 31
      %s300 = smul.addr %s297, 32
      %s301 = sadd.s32 %s299, %s300
      %s302 = smul.addr %s301, 4
      %s303 = scalar_lea.vmem %s1, %s302
      %p304 = pneg %p87
      %p305 = pneg %p84
      %s306 = sadd.s32 %s21, 1
      %s307 = smul.u32 %s306, 8
      %p308 = scmp.lt.s32.totalorder %s307, 15
      %s309 = scalar_select %p308, %s307, 15
      %s310 = smul.u32 2, %s309
      %p311 = scmp.lt.s32.totalorder %s20, 1
      %s312 = scalar_select %p311, %s20, 1
      %p313 = scmp.lt.s32.totalorder %s310, 31
      %s314 = scalar_select %p313, %s310, 31
      %s315 = smul.addr %s312, 32
      %s316 = sadd.s32 %s314, %s315
      %s317 = smul.addr %s316, 4
      %s318 = scalar_lea.vmem %s2, %s317
      %p319 = pneg %p123
      %p320 = pneg %p120
      %p321 = pneg %p144
      %p322 = pneg %p141
      %p323 = pneg %p165
      %p324 = pneg %p162
      %p325 = pneg %p193
      %p326 = pneg %p190
      %s327 = smul.u32 16, %s21
      %p328 = scmp.lt.s32.totalorder %s20, 1
      %s329 = scalar_select %p328, %s20, 1
      %p330 = scmp.lt.s32.totalorder %s327, 31
      %s331 = scalar_select %p330, %s327, 31
      %s332 = smul.addr %s329, 32
      %s333 = sadd.s32 %s331, %s332
      %s334 = smul.addr %s333, 8
      %s335 = scalar_lea.vmem %s5, %s334
      %s336 = smul.u32 16, %s21
      %p337 = scmp.lt.s32.totalorder %s20, 1
      %s338 = scalar_select %p337, %s20, 1
      %p339 = scmp.lt.s32.totalorder %s336, 31
      %s340 = scalar_select %p339, %s336, 31
      %s341 = smul.addr %s338, 32
      %s342 = sadd.s32 %s340, %s341
      %s343 = smul.addr %s342, 4
      %s344 = scalar_lea.vmem %s0, %s343
      %s345 = smul.u32 16, %s21
      %s346 = smul.u32 %s21, 8
      %s347 = ssub.s32 %s346, 1
      %p348 = scmp.gt.s32.totalorder %s347, 0
      %s349 = scalar_select %p348, %s347, 0
      %s350 = smul.u32 2, %s349
      %p351 = scmp.lt.s32.totalorder %s20, 1
      %s352 = scalar_select %p351, %s20, 1
      %p353 = scmp.lt.s32.totalorder %s350, 31
      %s354 = scalar_select %p353, %s350, 31
      %s355 = smul.addr %s352, 32
      %s356 = sadd.s32 %s354, %s355
      %s357 = smul.addr %s356, 4
      %s358 = scalar_lea.vmem %s1, %s357
      %s359 = smul.u32 %s21, 8
      %s360 = ssub.s32 %s359, 1
      %p361 = scmp.gt.s32.totalorder %s360, 0
      %s362 = scalar_select %p361, %s360, 0
      %s363 = smul.u32 2, %s362
      %s364 = sadd.s32 %s21, 1
      %s365 = smul.u32 %s364, 8
      %p366 = scmp.lt.s32.totalorder %s365, 15
      %s367 = scalar_select %p366, %s365, 15
      %s368 = smul.u32 2, %s367
      %p369 = scmp.lt.s32.totalorder %s20, 1
      %s370 = scalar_select %p369, %s20, 1
      %p371 = scmp.lt.s32.totalorder %s368, 31
      %s372 = scalar_select %p371, %s368, 31
      %s373 = smul.addr %s370, 32
      %s374 = sadd.s32 %s372, %s373
      %s375 = smul.addr %s374, 4
      %s376 = scalar_lea.vmem %s2, %s375
      %s377 = sadd.s32 %s21, 1
      %s378 = smul.u32 %s377, 8
      %p379 = scmp.lt.s32.totalorder %s378, 15
      %s380 = scalar_select %p379, %s378, 15
      %s381 = smul.u32 2, %s380
      %s382 = smul.u32 16, %s21
      %p383 = scmp.lt.s32.totalorder %s20, 1
      %s384 = scalar_select %p383, %s20, 1
      %p385 = scmp.lt.s32.totalorder %s382, 31
      %s386 = scalar_select %p385, %s382, 31
      %s387 = smul.addr %s384, 32
      %s388 = sadd.s32 %s386, %s387
      %s389 = smul.addr %s388, 8
      %s390 = scalar_lea.vmem %s5, %s389
      %s391 = smul.u32 16, %s21
      %392 = vst [vmem:[#allocation2] sm:$0xff] 0.0
      %393 = vst [vmem:[#allocation2 + $0xa8] sm:$0xff] 0.0
      %p394 = scmp.gt.s32.totalorder %s21, 0
      // Predicated region
      $region41: #{conv2_forward_nchw.1} parent=39 // pred_check
        %p395 = pneg %p394
      $region42: #{conv2_forward_nchw.1} parent=39 // pred_check_branch
        %397 = sbr.rel (%p395) target = $region44
      $region43: #{conv2_forward_nchw.1} parent=39 // pred_region
        %v398 = vld [vmem:[%s358] sm:$0xf]
        %v399 = vld [vmem:[%s358 + $0x4] sm:$0xf]
        %v400 = vunpack.c.l.bf16 %v398
        %v401 = vunpack.c.l.bf16 %v399
        %402 = vst [vmem:[#allocation2 + $0x8] sm:$0xff] %v400
        %403 = vst [vmem:[#allocation2 + $0x10] sm:$0xff] %v401
      $region44: #{conv2_forward_nchw.1} parent=39 // pred_fallthru
        _
      %p404 = scmp.eq.s32.totalorder %s21, 0
      // Predicated region
      $region45: #{conv2_forward_nchw.1} parent=39 // pred_check
        %p405 = pneg %p404
      $region46: #{conv2_forward_nchw.1} parent=39 // pred_check_branch
        %407 = sbr.rel (%p405) target = $region48
      $region47: #{conv2_forward_nchw.1} parent=39 // pred_region
        %408 = vst [vmem:[#allocation2 + $0x8] sm:$0xff] 0.0
        %409 = vst [vmem:[#allocation2 + $0x10] sm:$0xff] 0.0
      $region48: #{conv2_forward_nchw.1} parent=39 // pred_fallthru
        _
      %v410 = vld [vmem:[%s344] sm:$0xf]
      %v411 = vld [vmem:[%s344 + $0x4] sm:$0xf]
      %v412 = vld [vmem:[%s344 + $0x8] sm:$0xf]
      %v413 = vld [vmem:[%s344 + $0xc] sm:$0xf]
      %v414 = vld [vmem:[%s344 + $0x10] sm:$0xf]
      %v415 = vld [vmem:[%s344 + $0x14] sm:$0xf]
      %v416 = vld [vmem:[%s344 + $0x18] sm:$0xf]
      %v417 = vld [vmem:[%s344 + $0x1c] sm:$0xf]
      %v418 = vld [vmem:[%s344 + $0x20] sm:$0xf]
      %v419 = vld [vmem:[%s344 + $0x24] sm:$0xf]
      %v420 = vld [vmem:[%s344 + $0x28] sm:$0xf]
      %v421 = vld [vmem:[%s344 + $0x2c] sm:$0xf]
      %v422 = vld [vmem:[%s344 + $0x30] sm:$0xf]
      %v423 = vld [vmem:[%s344 + $0x34] sm:$0xf]
      %v424 = vld [vmem:[%s344 + $0x38] sm:$0xf]
      %v425 = vld [vmem:[%s344 + $0x3c] sm:$0xf]
      %v426 = vunpack.c.l.bf16 %v410
      %v427 = vunpack.c.l.bf16 %v411
      %v428 = vunpack.c.l.bf16 %v412
      %v429 = vunpack.c.l.bf16 %v413
      %v430 = vunpack.c.l.bf16 %v414
      %v431 = vunpack.c.l.bf16 %v415
      %v432 = vunpack.c.l.bf16 %v416
      %v433 = vunpack.c.l.bf16 %v417
      %v434 = vunpack.c.l.bf16 %v418
      %v435 = vunpack.c.l.bf16 %v419
      %v436 = vunpack.c.l.bf16 %v420
      %v437 = vunpack.c.l.bf16 %v421
      %v438 = vunpack.c.l.bf16 %v422
      %v439 = vunpack.c.l.bf16 %v423
      %v440 = vunpack.c.l.bf16 %v424
      %v441 = vunpack.c.l.bf16 %v425
      %442 = vst [vmem:[#allocation2 + $0x18] sm:$0xff] %v426
      %443 = vst [vmem:[#allocation2 + $0x20] sm:$0xff] %v427
      %444 = vst [vmem:[#allocation2 + $0x28] sm:$0xff] %v428
      %445 = vst [vmem:[#allocation2 + $0x30] sm:$0xff] %v429
      %446 = vst [vmem:[#allocation2 + $0x38] sm:$0xff] %v430
      %447 = vst [vmem:[#allocation2 + $0x40] sm:$0xff] %v431
      %448 = vst [vmem:[#allocation2 + $0x48] sm:$0xff] %v432
      %449 = vst [vmem:[#allocation2 + $0x50] sm:$0xff] %v433
      %450 = vst [vmem:[#allocation2 + $0x58] sm:$0xff] %v434
      %451 = vst [vmem:[#allocation2 + $0x60] sm:$0xff] %v435
      %452 = vst [vmem:[#allocation2 + $0x68] sm:$0xff] %v436
      %453 = vst [vmem:[#allocation2 + $0x70] sm:$0xff] %v437
      %454 = vst [vmem:[#allocation2 + $0x78] sm:$0xff] %v438
      %455 = vst [vmem:[#allocation2 + $0x80] sm:$0xff] %v439
      %456 = vst [vmem:[#allocation2 + $0x88] sm:$0xff] %v440
      %457 = vst [vmem:[#allocation2 + $0x90] sm:$0xff] %v441
      %p458 = scmp.lt.s32.totalorder %s21, 1
      // Predicated region
      $region49: #{conv2_forward_nchw.1} parent=39 // pred_check
        %p459 = pneg %p458
      $region50: #{conv2_forward_nchw.1} parent=39 // pred_check_branch
        %461 = sbr.rel (%p459) target = $region52
      $region51: #{conv2_forward_nchw.1} parent=39 // pred_region
        %v462 = vld [vmem:[%s376] sm:$0xf]
        %v463 = vld [vmem:[%s376 + $0x4] sm:$0xf]
        %v464 = vunpack.c.l.bf16 %v462
        %v465 = vunpack.c.l.bf16 %v463
        %466 = vst [vmem:[#allocation2 + $0x98] sm:$0xff] %v464
        %467 = vst [vmem:[#allocation2 + $0xa0] sm:$0xff] %v465
      $region52: #{conv2_forward_nchw.1} parent=39 // pred_fallthru
        _
      %p468 = scmp.eq.s32.totalorder %s21, 1
      // Predicated region
      $region53: #{conv2_forward_nchw.1} parent=39 // pred_check
        %p469 = pneg %p468
      $region54: #{conv2_forward_nchw.1} parent=39 // pred_check_branch
        %471 = sbr.rel (%p469) target = $region56
      $region55: #{conv2_forward_nchw.1} parent=39 // pred_region
        %472 = vst [vmem:[#allocation2 + $0x98] sm:$0xff] 0.0
        %473 = vst [vmem:[#allocation2 + $0xa0] sm:$0xff] 0.0
      $region56: #{conv2_forward_nchw.1} parent=39 // pred_fallthru
        _
      %v474 = vlaneseq
      %v475 = vshrl.u32 %v474, 7
      %v476 = vadd.s32 %v475, 8
      %v477 = vadd.s32 %v475, 16
      %v478 = vadd.s32 %v475, 24
      %v479 = vadd.s32 %v475, 32
      %v480 = vadd.s32 %v475, 40
      %v481 = vadd.s32 %v475, 48
      %v482 = vadd.s32 %v475, 56
      %v483 = vadd.s32 %v475, 64
      %v484 = vadd.s32 %v475, 72
      %v485 = vadd.s32 %v475, 80
      %v486 = vadd.s32 %v475, 88
      %v487 = vadd.s32 %v475, 96
      %v488 = vadd.s32 %v475, 104
      %v489 = vadd.s32 %v475, 112
      %v490 = vadd.s32 %v475, 120
      %vm491 = vcmp.lt.s32.totalorder %v475, 0
      %v492 = vsub.s32 0, %v475
      %v493 = vsel %vm491, %v492, %v475
      %v494 = vshrl.u32 %v493, 4
      %v495 = vand.u32 %v493, 15
      %v496 = vsub.s32 0, %v495
      %v497 = vsel %vm491, %v496, %v495
      %vm498 = vcmp.lt.s32.totalorder %v476, 0
      %v499 = vsub.s32 0, %v476
      %v500 = vsel %vm498, %v499, %v476
      %v501 = vshrl.u32 %v500, 4
      %v502 = vand.u32 %v500, 15
      %v503 = vsub.s32 0, %v502
      %v504 = vsel %vm498, %v503, %v502
      %vm505 = vcmp.lt.s32.totalorder %v477, 0
      %v506 = vsub.s32 0, %v477
      %v507 = vsel %vm505, %v506, %v477
      %v508 = vshrl.u32 %v507, 4
      %v509 = vand.u32 %v507, 15
      %v510 = vsub.s32 0, %v509
      %v511 = vsel %vm505, %v510, %v509
      %vm512 = vcmp.lt.s32.totalorder %v478, 0
      %v513 = vsub.s32 0, %v478
      %v514 = vsel %vm512, %v513, %v478
      %v515 = vshrl.u32 %v514, 4
      %v516 = vand.u32 %v514, 15
      %v517 = vsub.s32 0, %v516
      %v518 = vsel %vm512, %v517, %v516
      %vm519 = vcmp.lt.s32.totalorder %v479, 0
      %v520 = vsub.s32 0, %v479
      %v521 = vsel %vm519, %v520, %v479
      %v522 = vshrl.u32 %v521, 4
      %v523 = vand.u32 %v521, 15
      %v524 = vsub.s32 0, %v523
      %v525 = vsel %vm519, %v524, %v523
      %vm526 = vcmp.lt.s32.totalorder %v480, 0
      %v527 = vsub.s32 0, %v480
      %v528 = vsel %vm526, %v527, %v480
      %v529 = vshrl.u32 %v528, 4
      %v530 = vand.u32 %v528, 15
      %v531 = vsub.s32 0, %v530
      %v532 = vsel %vm526, %v531, %v530
      %vm533 = vcmp.lt.s32.totalorder %v481, 0
      %v534 = vsub.s32 0, %v481
      %v535 = vsel %vm533, %v534, %v481
      %v536 = vshrl.u32 %v535, 4
      %v537 = vand.u32 %v535, 15
      %v538 = vsub.s32 0, %v537
      %v539 = vsel %vm533, %v538, %v537
      %vm540 = vcmp.lt.s32.totalorder %v482, 0
      %v541 = vsub.s32 0, %v482
      %v542 = vsel %vm540, %v541, %v482
      %v543 = vshrl.u32 %v542, 4
      %v544 = vand.u32 %v542, 15
      %v545 = vsub.s32 0, %v544
      %v546 = vsel %vm540, %v545, %v544
      %vm547 = vcmp.lt.s32.totalorder %v483, 0
      %v548 = vsub.s32 0, %v483
      %v549 = vsel %vm547, %v548, %v483
      %v550 = vshrl.u32 %v549, 4
      %v551 = vand.u32 %v549, 15
      %v552 = vsub.s32 0, %v551
      %v553 = vsel %vm547, %v552, %v551
      %vm554 = vcmp.lt.s32.totalorder %v484, 0
      %v555 = vsub.s32 0, %v484
      %v556 = vsel %vm554, %v555, %v484
      %v557 = vshrl.u32 %v556, 4
      %v558 = vand.u32 %v556, 15
      %v559 = vsub.s32 0, %v558
      %v560 = vsel %vm554, %v559, %v558
      %vm561 = vcmp.lt.s32.totalorder %v485, 0
      %v562 = vsub.s32 0, %v485
      %v563 = vsel %vm561, %v562, %v485
      %v564 = vshrl.u32 %v563, 4
      %v565 = vand.u32 %v563, 15
      %v566 = vsub.s32 0, %v565
      %v567 = vsel %vm561, %v566, %v565
      %vm568 = vcmp.lt.s32.totalorder %v486, 0
      %v569 = vsub.s32 0, %v486
      %v570 = vsel %vm568, %v569, %v486
      %v571 = vshrl.u32 %v570, 4
      %v572 = vand.u32 %v570, 15
      %v573 = vsub.s32 0, %v572
      %v574 = vsel %vm568, %v573, %v572
      %vm575 = vcmp.lt.s32.totalorder %v487, 0
      %v576 = vsub.s32 0, %v487
      %v577 = vsel %vm575, %v576, %v487
      %v578 = vshrl.u32 %v577, 4
      %v579 = vand.u32 %v577, 15
      %v580 = vsub.s32 0, %v579
      %v581 = vsel %vm575, %v580, %v579
      %vm582 = vcmp.lt.s32.totalorder %v488, 0
      %v583 = vsub.s32 0, %v488
      %v584 = vsel %vm582, %v583, %v488
      %v585 = vshrl.u32 %v584, 4
      %v586 = vand.u32 %v584, 15
      %v587 = vsub.s32 0, %v586
      %v588 = vsel %vm582, %v587, %v586
      %vm589 = vcmp.lt.s32.totalorder %v489, 0
      %v590 = vsub.s32 0, %v489
      %v591 = vsel %vm589, %v590, %v489
      %v592 = vshrl.u32 %v591, 4
      %v593 = vand.u32 %v591, 15
      %v594 = vsub.s32 0, %v593
      %v595 = vsel %vm589, %v594, %v593
      %vm596 = vcmp.lt.s32.totalorder %v490, 0
      %v597 = vsub.s32 0, %v490
      %v598 = vsel %vm596, %v597, %v490
      %v599 = vshrl.u32 %v598, 4
      %v600 = vand.u32 %v598, 15
      %v601 = vsub.s32 0, %v600
      %v602 = vsel %vm596, %v601, %v600
      %vm603 = vcmp.ne.s32.totalorder %v497, 0
      %vm604 = vcmp.ne.s32.totalorder %v504, 0
      %vm605 = vcmp.ne.s32.totalorder %v511, 0
      %vm606 = vcmp.ne.s32.totalorder %v518, 0
      %vm607 = vcmp.ne.s32.totalorder %v525, 0
      %vm608 = vcmp.ne.s32.totalorder %v532, 0
      %vm609 = vcmp.ne.s32.totalorder %v539, 0
      %vm610 = vcmp.ne.s32.totalorder %v546, 0
      %vm611 = vcmp.ne.s32.totalorder %v553, 0
      %vm612 = vcmp.ne.s32.totalorder %v560, 0
      %vm613 = vcmp.ne.s32.totalorder %v567, 0
      %vm614 = vcmp.ne.s32.totalorder %v574, 0
      %vm615 = vcmp.ne.s32.totalorder %v581, 0
      %vm616 = vcmp.ne.s32.totalorder %v588, 0
      %vm617 = vcmp.ne.s32.totalorder %v595, 0
      %vm618 = vcmp.ne.s32.totalorder %v602, 0
      %vm619 = vcmp.lt.s32.totalorder %v497, 0
      %vm620 = vcmp.lt.s32.totalorder %v504, 0
      %vm621 = vcmp.lt.s32.totalorder %v511, 0
      %vm622 = vcmp.lt.s32.totalorder %v518, 0
      %vm623 = vcmp.lt.s32.totalorder %v525, 0
      %vm624 = vcmp.lt.s32.totalorder %v532, 0
      %vm625 = vcmp.lt.s32.totalorder %v539, 0
      %vm626 = vcmp.lt.s32.totalorder %v546, 0
      %vm627 = vcmp.lt.s32.totalorder %v553, 0
      %vm628 = vcmp.lt.s32.totalorder %v560, 0
      %vm629 = vcmp.lt.s32.totalorder %v567, 0
      %vm630 = vcmp.lt.s32.totalorder %v574, 0
      %vm631 = vcmp.lt.s32.totalorder %v581, 0
      %vm632 = vcmp.lt.s32.totalorder %v588, 0
      %vm633 = vcmp.lt.s32.totalorder %v595, 0
      %vm634 = vcmp.lt.s32.totalorder %v602, 0
      %vm635 = vmand %vm619, %vm603
      %vm636 = vmand %vm620, %vm604
      %vm637 = vmand %vm621, %vm605
      %vm638 = vmand %vm622, %vm606
      %vm639 = vmand %vm623, %vm607
      %vm640 = vmand %vm624, %vm608
      %vm641 = vmand %vm625, %vm609
      %vm642 = vmand %vm626, %vm610
      %vm643 = vmand %vm627, %vm611
      %vm644 = vmand %vm628, %vm612
      %vm645 = vmand %vm629, %vm613
      %vm646 = vmand %vm630, %vm614
      %vm647 = vmand %vm631, %vm615
      %vm648 = vmand %vm632, %vm616
      %vm649 = vmand %vm633, %vm617
      %vm650 = vmand %vm634, %vm618
      %v651 = vadd.s32 %v497, 16
      %v652 = vadd.s32 %v504, 16
      %v653 = vadd.s32 %v511, 16
      %v654 = vadd.s32 %v518, 16
      %v655 = vadd.s32 %v525, 16
      %v656 = vadd.s32 %v532, 16
      %v657 = vadd.s32 %v539, 16
      %v658 = vadd.s32 %v546, 16
      %v659 = vadd.s32 %v553, 16
      %v660 = vadd.s32 %v560, 16
      %v661 = vadd.s32 %v567, 16
      %v662 = vadd.s32 %v574, 16
      %v663 = vadd.s32 %v581, 16
      %v664 = vadd.s32 %v588, 16
      %v665 = vadd.s32 %v595, 16
      %v666 = vadd.s32 %v602, 16
      %v667 = vsel %vm635, %v651, %v497
      %v668 = vsel %vm636, %v652, %v504
      %v669 = vsel %vm637, %v653, %v511
      %v670 = vsel %vm638, %v654, %v518
      %v671 = vsel %vm639, %v655, %v525
      %v672 = vsel %vm640, %v656, %v532
      %v673 = vsel %vm641, %v657, %v539
      %v674 = vsel %vm642, %v658, %v546
      %v675 = vsel %vm643, %v659, %v553
      %v676 = vsel %vm644, %v660, %v560
      %v677 = vsel %vm645, %v661, %v567
      %v678 = vsel %vm646, %v662, %v574
      %v679 = vsel %vm647, %v663, %v581
      %v680 = vsel %vm648, %v664, %v588
      %v681 = vsel %vm649, %v665, %v595
      %v682 = vsel %vm650, %v666, %v602
      %v683 = vld [vmem:[#allocation2 + $0x7] sm:$0xff]
      %v684 = vld [vmem:[#allocation2 + $0xf] sm:$0xff]
      %v685 = vld [vmem:[#allocation2 + $0x17] sm:$0xff]
      %v686 = vld [vmem:[#allocation2 + $0x1f] sm:$0xff]
      %v687 = vld [vmem:[#allocation2 + $0x27] sm:$0xff]
      %v688 = vld [vmem:[#allocation2 + $0x2f] sm:$0xff]
      %v689 = vld [vmem:[#allocation2 + $0x37] sm:$0xff]
      %v690 = vld [vmem:[#allocation2 + $0x3f] sm:$0xff]
      %v691 = vld [vmem:[#allocation2 + $0x47] sm:$0xff]
      %v692 = vld [vmem:[#allocation2 + $0x4f] sm:$0xff]
      %v693 = vld [vmem:[#allocation2 + $0x57] sm:$0xff]
      %v694 = vld [vmem:[#allocation2 + $0x5f] sm:$0xff]
      %v695 = vld [vmem:[#allocation2 + $0x67] sm:$0xff]
      %v696 = vld [vmem:[#allocation2 + $0x6f] sm:$0xff]
      %v697 = vld [vmem:[#allocation2 + $0x77] sm:$0xff]
      %v698 = vld [vmem:[#allocation2 + $0x7f] sm:$0xff]
      %v699 = vpack.c.bf16 %v684, %v683
      %v700 = vpack.c.bf16 %v686, %v685
      %v701 = vpack.c.bf16 %v688, %v687
      %v702 = vpack.c.bf16 %v690, %v689
      %v703 = vpack.c.bf16 %v692, %v691
      %v704 = vpack.c.bf16 %v694, %v693
      %v705 = vpack.c.bf16 %v696, %v695
      %v706 = vpack.c.bf16 %v698, %v697
      %v707 = vld [vmem:[%s3] sm:$0xf]
      %v708 = vld [vmem:[%s3 + $0x4] sm:$0xf]
      %v709 = vld [vmem:[%s3 + $0x8] sm:$0xf]
      %v710 = vld [vmem:[%s3 + $0xc] sm:$0xf]
      %v711 = vld [vmem:[%s3 + $0x10] sm:$0xf]
      %v712 = vld [vmem:[%s3 + $0x14] sm:$0xf]
      %v713 = vld [vmem:[%s3 + $0x18] sm:$0xf]
      %v714 = vld [vmem:[%s3 + $0x1c] sm:$0xf]
      %v715 = vld [vmem:[%s3 + $0x20] sm:$0xf]
      %v716 = vld [vmem:[%s3 + $0x24] sm:$0xf]
      %v717 = vld [vmem:[%s3 + $0x28] sm:$0xf]
      %v718 = vld [vmem:[%s3 + $0x2c] sm:$0xf]
      %v719 = vld [vmem:[%s3 + $0x30] sm:$0xf]
      %v720 = vld [vmem:[%s3 + $0x34] sm:$0xf]
      %v721 = vld [vmem:[%s3 + $0x38] sm:$0xf]
      %v722 = vld [vmem:[%s3 + $0x3c] sm:$0xf]
      %v739 = vunpack.c.l.b16 %v707
      %v740 = vunpack.c.l.b16 %v708
      %v741 = vunpack.c.l.b16 %v709
      %v742 = vunpack.c.l.b16 %v710
      %v743 = vunpack.c.l.b16 %v711
      %v744 = vunpack.c.l.b16 %v712
      %v745 = vunpack.c.l.b16 %v713
      %v746 = vunpack.c.l.b16 %v714
      %v747 = vunpack.c.l.b16 %v715
      %v748 = vunpack.c.l.b16 %v716
      %v749 = vunpack.c.l.b16 %v717
      %v750 = vunpack.c.l.b16 %v718
      %v751 = vunpack.c.l.b16 %v719
      %v752 = vunpack.c.l.b16 %v720
      %v753 = vunpack.c.l.b16 %v721
      %v754 = vunpack.c.l.b16 %v722
      %v755 = vpack.c.b16 %v740, %v739
      %v756 = vpack.c.b16 %v742, %v741
      %v757 = vpack.c.b16 %v744, %v743
      %v758 = vpack.c.b16 %v746, %v745
      %v759 = vpack.c.b16 %v748, %v747
      %v760 = vpack.c.b16 %v750, %v749
      %v761 = vpack.c.b16 %v752, %v751
      %v762 = vpack.c.b16 %v754, %v753
      %771 = vmatpush.bf16.msra.mxu0 %v762
      %772 = vmatpush.bf16.msra.mxu0 %v761
      %773 = vmatpush.bf16.msra.mxu0 %v760
      %774 = vmatpush.bf16.msra.mxu0 %v759
      %775 = vmatpush.bf16.msra.mxu0 %v758
      %776 = vmatpush.bf16.msra.mxu0 %v757
      %777 = vmatpush.bf16.msra.mxu0 %v756
      %778 = vmatpush.bf16.msra.mxu0 %v755
      %779 = vmatmul.bf16.gmra.mxu0 %v699
      %v780 = vpop.f32.mrf.mxu0
      %v781 = vadd.f32 0.0, %v780
      %v782 = vpop.f32.mrf.mxu0
      %v783 = vadd.f32 0.0, %v782
      %784 = vmatmul.bf16.gmra.mxu0 %v700
      %v785 = vpop.f32.mrf.mxu0
      %v786 = vadd.f32 0.0, %v785
      %v787 = vpop.f32.mrf.mxu0
      %v788 = vadd.f32 0.0, %v787
      %789 = vmatmul.bf16.gmra.mxu0 %v701
      %v790 = vpop.f32.mrf.mxu0
      %v791 = vadd.f32 0.0, %v790
      %v792 = vpop.f32.mrf.mxu0
      %v793 = vadd.f32 0.0, %v792
      %794 = vmatmul.bf16.gmra.mxu0 %v702
      %v795 = vpop.f32.mrf.mxu0
      %v796 = vadd.f32 0.0, %v795
      %v797 = vpop.f32.mrf.mxu0
      %v798 = vadd.f32 0.0, %v797
      %799 = vmatmul.bf16.gmra.mxu0 %v703
      %v800 = vpop.f32.mrf.mxu0
      %v801 = vadd.f32 0.0, %v800
      %v802 = vpop.f32.mrf.mxu0
      %v803 = vadd.f32 0.0, %v802
      %804 = vmatmul.bf16.gmra.mxu0 %v704
      %v805 = vpop.f32.mrf.mxu0
      %v806 = vadd.f32 0.0, %v805
      %v807 = vpop.f32.mrf.mxu0
      %v808 = vadd.f32 0.0, %v807
      %809 = vmatmul.bf16.gmra.mxu0 %v705
      %v810 = vpop.f32.mrf.mxu0
      %v811 = vadd.f32 0.0, %v810
      %v812 = vpop.f32.mrf.mxu0
      %v813 = vadd.f32 0.0, %v812
      %814 = vmatmul.bf16.gmra.mxu0 %v706
      %v815 = vpop.f32.mrf.mxu0
      %v816 = vadd.f32 0.0, %v815
      %v817 = vpop.f32.mrf.mxu0
      %v818 = vadd.f32 0.0, %v817
      %819 = vdwg.mxu0
      %vm820 = vcmp.ge.s32.totalorder %v667, 1
      %vm821 = vcmp.ge.s32.totalorder %v668, 1
      %vm822 = vcmp.ge.s32.totalorder %v669, 1
      %vm823 = vcmp.ge.s32.totalorder %v670, 1
      %vm824 = vcmp.ge.s32.totalorder %v671, 1
      %vm825 = vcmp.ge.s32.totalorder %v672, 1
      %vm826 = vcmp.ge.s32.totalorder %v673, 1
      %vm827 = vcmp.ge.s32.totalorder %v674, 1
      %vm828 = vcmp.ge.s32.totalorder %v675, 1
      %vm829 = vcmp.ge.s32.totalorder %v676, 1
      %vm830 = vcmp.ge.s32.totalorder %v677, 1
      %vm831 = vcmp.ge.s32.totalorder %v678, 1
      %vm832 = vcmp.ge.s32.totalorder %v679, 1
      %vm833 = vcmp.ge.s32.totalorder %v680, 1
      %vm834 = vcmp.ge.s32.totalorder %v681, 1
      %vm835 = vcmp.ge.s32.totalorder %v682, 1
      %v836 = vsel %vm820, 1, 0
      %v837 = vsel %vm821, 1, 0
      %v838 = vsel %vm822, 1, 0
      %v839 = vsel %vm823, 1, 0
      %v840 = vsel %vm824, 1, 0
      %v841 = vsel %vm825, 1, 0
      %v842 = vsel %vm826, 1, 0
      %v843 = vsel %vm827, 1, 0
      %v844 = vsel %vm828, 1, 0
      %v845 = vsel %vm829, 1, 0
      %v846 = vsel %vm830, 1, 0
      %v847 = vsel %vm831, 1, 0
      %v848 = vsel %vm832, 1, 0
      %v849 = vsel %vm833, 1, 0
      %v850 = vsel %vm834, 1, 0
      %v851 = vsel %vm835, 1, 0
      %vm852 = vcmp.eq.s32.totalorder %v836, 1
      %vm853 = vcmp.eq.s32.totalorder %v837, 1
      %vm854 = vcmp.eq.s32.totalorder %v838, 1
      %vm855 = vcmp.eq.s32.totalorder %v839, 1
      %vm856 = vcmp.eq.s32.totalorder %v840, 1
      %vm857 = vcmp.eq.s32.totalorder %v841, 1
      %vm858 = vcmp.eq.s32.totalorder %v842, 1
      %vm859 = vcmp.eq.s32.totalorder %v843, 1
      %vm860 = vcmp.eq.s32.totalorder %v844, 1
      %vm861 = vcmp.eq.s32.totalorder %v845, 1
      %vm862 = vcmp.eq.s32.totalorder %v846, 1
      %vm863 = vcmp.eq.s32.totalorder %v847, 1
      %vm864 = vcmp.eq.s32.totalorder %v848, 1
      %vm865 = vcmp.eq.s32.totalorder %v849, 1
      %vm866 = vcmp.eq.s32.totalorder %v850, 1
      %vm867 = vcmp.eq.s32.totalorder %v851, 1
      %v868 = vsel %vm852, %v781, 0.0
      %v869 = vsel %vm853, %v783, 0.0
      %v870 = vsel %vm854, %v786, 0.0
      %v871 = vsel %vm855, %v788, 0.0
      %v872 = vsel %vm856, %v791, 0.0
      %v873 = vsel %vm857, %v793, 0.0
      %v874 = vsel %vm858, %v796, 0.0
      %v875 = vsel %vm859, %v798, 0.0
      %v876 = vsel %vm860, %v801, 0.0
      %v877 = vsel %vm861, %v803, 0.0
      %v878 = vsel %vm862, %v806, 0.0
      %v879 = vsel %vm863, %v808, 0.0
      %v880 = vsel %vm864, %v811, 0.0
      %v881 = vsel %vm865, %v813, 0.0
      %v882 = vsel %vm866, %v816, 0.0
      %v883 = vsel %vm867, %v818, 0.0
      %v884 = vld [vmem:[#allocation2 + $0x8] sm:$0xff]
      %v885 = vld [vmem:[#allocation2 + $0x10] sm:$0xff]
      %v886 = vld [vmem:[#allocation2 + $0x18] sm:$0xff]
      %v887 = vld [vmem:[#allocation2 + $0x20] sm:$0xff]
      %v888 = vld [vmem:[#allocation2 + $0x28] sm:$0xff]
      %v889 = vld [vmem:[#allocation2 + $0x30] sm:$0xff]
      %v890 = vld [vmem:[#allocation2 + $0x38] sm:$0xff]
      %v891 = vld [vmem:[#allocation2 + $0x40] sm:$0xff]
      %v892 = vld [vmem:[#allocation2 + $0x48] sm:$0xff]
      %v893 = vld [vmem:[#allocation2 + $0x50] sm:$0xff]
      %v894 = vld [vmem:[#allocation2 + $0x58] sm:$0xff]
      %v895 = vld [vmem:[#allocation2 + $0x60] sm:$0xff]
      %v896 = vld [vmem:[#allocation2 + $0x68] sm:$0xff]
      %v897 = vld [vmem:[#allocation2 + $0x70] sm:$0xff]
      %v898 = vld [vmem:[#allocation2 + $0x78] sm:$0xff]
      %v899 = vld [vmem:[#allocation2 + $0x80] sm:$0xff]
      %v900 = vpack.c.bf16 %v885, %v884
      %v901 = vpack.c.bf16 %v887, %v886
      %v902 = vpack.c.bf16 %v889, %v888
      %v903 = vpack.c.bf16 %v891, %v890
      %v904 = vpack.c.bf16 %v893, %v892
      %v905 = vpack.c.bf16 %v895, %v894
      %v906 = vpack.c.bf16 %v897, %v896
      %v907 = vpack.c.bf16 %v899, %v898
      %s908 = scalar_lea.vmem %s3, 64
      %v909 = vld [vmem:[%s908] sm:$0xf]
      %v910 = vld [vmem:[%s908 + $0x4] sm:$0xf]
      %v911 = vld [vmem:[%s908 + $0x8] sm:$0xf]
      %v912 = vld [vmem:[%s908 + $0xc] sm:$0xf]
      %v913 = vld [vmem:[%s908 + $0x10] sm:$0xf]
      %v914 = vld [vmem:[%s908 + $0x14] sm:$0xf]
      %v915 = vld [vmem:[%s908 + $0x18] sm:$0xf]
      %v916 = vld [vmem:[%s908 + $0x1c] sm:$0xf]
      %v917 = vld [vmem:[%s908 + $0x20] sm:$0xf]
      %v918 = vld [vmem:[%s908 + $0x24] sm:$0xf]
      %v919 = vld [vmem:[%s908 + $0x28] sm:$0xf]
      %v920 = vld [vmem:[%s908 + $0x2c] sm:$0xf]
      %v921 = vld [vmem:[%s908 + $0x30] sm:$0xf]
      %v922 = vld [vmem:[%s908 + $0x34] sm:$0xf]
      %v923 = vld [vmem:[%s908 + $0x38] sm:$0xf]
      %v924 = vld [vmem:[%s908 + $0x3c] sm:$0xf]
      %v941 = vunpack.c.l.b16 %v909
      %v942 = vunpack.c.l.b16 %v910
      %v943 = vunpack.c.l.b16 %v911
      %v944 = vunpack.c.l.b16 %v912
      %v945 = vunpack.c.l.b16 %v913
      %v946 = vunpack.c.l.b16 %v914
      %v947 = vunpack.c.l.b16 %v915
      %v948 = vunpack.c.l.b16 %v916
      %v949 = vunpack.c.l.b16 %v917
      %v950 = vunpack.c.l.b16 %v918
      %v951 = vunpack.c.l.b16 %v919
      %v952 = vunpack.c.l.b16 %v920
      %v953 = vunpack.c.l.b16 %v921
      %v954 = vunpack.c.l.b16 %v922
      %v955 = vunpack.c.l.b16 %v923
      %v956 = vunpack.c.l.b16 %v924
      %v957 = vpack.c.b16 %v942, %v941
      %v958 = vpack.c.b16 %v944, %v943
      %v959 = vpack.c.b16 %v946, %v945
      %v960 = vpack.c.b16 %v948, %v947
      %v961 = vpack.c.b16 %v950, %v949
      %v962 = vpack.c.b16 %v952, %v951
      %v963 = vpack.c.b16 %v954, %v953
      %v964 = vpack.c.b16 %v956, %v955
      %973 = vmatpush.bf16.msra.mxu0 %v964
      %974 = vmatpush.bf16.msra.mxu0 %v963
      %975 = vmatpush.bf16.msra.mxu0 %v962
      %976 = vmatpush.bf16.msra.mxu0 %v961
      %977 = vmatpush.bf16.msra.mxu0 %v960
      %978 = vmatpush.bf16.msra.mxu0 %v959
      %979 = vmatpush.bf16.msra.mxu0 %v958
      %980 = vmatpush.bf16.msra.mxu0 %v957
      %981 = vmatmul.bf16.gmra.mxu0 %v900
      %v982 = vpop.f32.mrf.mxu0
      %v983 = vadd.f32 0.0, %v982
      %v984 = vpop.f32.mrf.mxu0
      %v985 = vadd.f32 0.0, %v984
      %986 = vmatmul.bf16.gmra.mxu0 %v901
      %v987 = vpop.f32.mrf.mxu0
      %v988 = vadd.f32 0.0, %v987
      %v989 = vpop.f32.mrf.mxu0
      %v990 = vadd.f32 0.0, %v989
      %991 = vmatmul.bf16.gmra.mxu0 %v902
      %v992 = vpop.f32.mrf.mxu0
      %v993 = vadd.f32 0.0, %v992
      %v994 = vpop.f32.mrf.mxu0
      %v995 = vadd.f32 0.0, %v994
      %996 = vmatmul.bf16.gmra.mxu0 %v903
      %v997 = vpop.f32.mrf.mxu0
      %v998 = vadd.f32 0.0, %v997
      %v999 = vpop.f32.mrf.mxu0
      %v1000 = vadd.f32 0.0, %v999
      %1001 = vmatmul.bf16.gmra.mxu0 %v904
      %v1002 = vpop.f32.mrf.mxu0
      %v1003 = vadd.f32 0.0, %v1002
      %v1004 = vpop.f32.mrf.mxu0
      %v1005 = vadd.f32 0.0, %v1004
      %1006 = vmatmul.bf16.gmra.mxu0 %v905
      %v1007 = vpop.f32.mrf.mxu0
      %v1008 = vadd.f32 0.0, %v1007
      %v1009 = vpop.f32.mrf.mxu0
      %v1010 = vadd.f32 0.0, %v1009
      %1011 = vmatmul.bf16.gmra.mxu0 %v906
      %v1012 = vpop.f32.mrf.mxu0
      %v1013 = vadd.f32 0.0, %v1012
      %v1014 = vpop.f32.mrf.mxu0
      %v1015 = vadd.f32 0.0, %v1014
      %1016 = vmatmul.bf16.gmra.mxu0 %v907
      %v1017 = vpop.f32.mrf.mxu0
      %v1018 = vadd.f32 0.0, %v1017
      %v1019 = vpop.f32.mrf.mxu0
      %v1020 = vadd.f32 0.0, %v1019
      %1021 = vdwg.mxu0
      %v1022 = vadd.f32 %v868, %v983
      %v1023 = vadd.f32 %v869, %v985
      %v1024 = vadd.f32 %v870, %v988
      %v1025 = vadd.f32 %v871, %v990
      %v1026 = vadd.f32 %v872, %v993
      %v1027 = vadd.f32 %v873, %v995
      %v1028 = vadd.f32 %v874, %v998
      %v1029 = vadd.f32 %v875, %v1000
      %v1030 = vadd.f32 %v876, %v1003
      %v1031 = vadd.f32 %v877, %v1005
      %v1032 = vadd.f32 %v878, %v1008
      %v1033 = vadd.f32 %v879, %v1010
      %v1034 = vadd.f32 %v880, %v1013
      %v1035 = vadd.f32 %v881, %v1015
      %v1036 = vadd.f32 %v882, %v1018
      %v1037 = vadd.f32 %v883, %v1020
      %v1038 = vld [vmem:[#allocation2 + $0x9] sm:$0xff]
      %v1039 = vld [vmem:[#allocation2 + $0x11] sm:$0xff]
      %v1040 = vld [vmem:[#allocation2 + $0x19] sm:$0xff]
      %v1041 = vld [vmem:[#allocation2 + $0x21] sm:$0xff]
      %v1042 = vld [vmem:[#allocation2 + $0x29] sm:$0xff]
      %v1043 = vld [vmem:[#allocation2 + $0x31] sm:$0xff]
      %v1044 = vld [vmem:[#allocation2 + $0x39] sm:$0xff]
      %v1045 = vld [vmem:[#allocation2 + $0x41] sm:$0xff]
      %v1046 = vld [vmem:[#allocation2 + $0x49] sm:$0xff]
      %v1047 = vld [vmem:[#allocation2 + $0x51] sm:$0xff]
      %v1048 = vld [vmem:[#allocation2 + $0x59] sm:$0xff]
      %v1049 = vld [vmem:[#allocation2 + $0x61] sm:$0xff]
      %v1050 = vld [vmem:[#allocation2 + $0x69] sm:$0xff]
      %v1051 = vld [vmem:[#allocation2 + $0x71] sm:$0xff]
      %v1052 = vld [vmem:[#allocation2 + $0x79] sm:$0xff]
      %v1053 = vld [vmem:[#allocation2 + $0x81] sm:$0xff]
      %v1054 = vpack.c.bf16 %v1039, %v1038
      %v1055 = vpack.c.bf16 %v1041, %v1040
      %v1056 = vpack.c.bf16 %v1043, %v1042
      %v1057 = vpack.c.bf16 %v1045, %v1044
      %v1058 = vpack.c.bf16 %v1047, %v1046
      %v1059 = vpack.c.bf16 %v1049, %v1048
      %v1060 = vpack.c.bf16 %v1051, %v1050
      %v1061 = vpack.c.bf16 %v1053, %v1052
      %s1062 = scalar_lea.vmem %s3, 128
      %v1063 = vld [vmem:[%s1062] sm:$0xf]
      %v1064 = vld [vmem:[%s1062 + $0x4] sm:$0xf]
      %v1065 = vld [vmem:[%s1062 + $0x8] sm:$0xf]
      %v1066 = vld [vmem:[%s1062 + $0xc] sm:$0xf]
      %v1067 = vld [vmem:[%s1062 + $0x10] sm:$0xf]
      %v1068 = vld [vmem:[%s1062 + $0x14] sm:$0xf]
      %v1069 = vld [vmem:[%s1062 + $0x18] sm:$0xf]
      %v1070 = vld [vmem:[%s1062 + $0x1c] sm:$0xf]
      %v1071 = vld [vmem:[%s1062 + $0x20] sm:$0xf]
      %v1072 = vld [vmem:[%s1062 + $0x24] sm:$0xf]
      %v1073 = vld [vmem:[%s1062 + $0x28] sm:$0xf]
      %v1074 = vld [vmem:[%s1062 + $0x2c] sm:$0xf]
      %v1075 = vld [vmem:[%s1062 + $0x30] sm:$0xf]
      %v1076 = vld [vmem:[%s1062 + $0x34] sm:$0xf]
      %v1077 = vld [vmem:[%s1062 + $0x38] sm:$0xf]
      %v1078 = vld [vmem:[%s1062 + $0x3c] sm:$0xf]
      %v1095 = vunpack.c.l.b16 %v1063
      %v1096 = vunpack.c.l.b16 %v1064
      %v1097 = vunpack.c.l.b16 %v1065
      %v1098 = vunpack.c.l.b16 %v1066
      %v1099 = vunpack.c.l.b16 %v1067
      %v1100 = vunpack.c.l.b16 %v1068
      %v1101 = vunpack.c.l.b16 %v1069
      %v1102 = vunpack.c.l.b16 %v1070
      %v1103 = vunpack.c.l.b16 %v1071
      %v1104 = vunpack.c.l.b16 %v1072
      %v1105 = vunpack.c.l.b16 %v1073
      %v1106 = vunpack.c.l.b16 %v1074
      %v1107 = vunpack.c.l.b16 %v1075
      %v1108 = vunpack.c.l.b16 %v1076
      %v1109 = vunpack.c.l.b16 %v1077
      %v1110 = vunpack.c.l.b16 %v1078
      %v1111 = vpack.c.b16 %v1096, %v1095
      %v1112 = vpack.c.b16 %v1098, %v1097
      %v1113 = vpack.c.b16 %v1100, %v1099
      %v1114 = vpack.c.b16 %v1102, %v1101
      %v1115 = vpack.c.b16 %v1104, %v1103
      %v1116 = vpack.c.b16 %v1106, %v1105
      %v1117 = vpack.c.b16 %v1108, %v1107
      %v1118 = vpack.c.b16 %v1110, %v1109
      %1127 = vmatpush.bf16.msra.mxu0 %v1118
      %1128 = vmatpush.bf16.msra.mxu0 %v1117
      %1129 = vmatpush.bf16.msra.mxu0 %v1116
      %1130 = vmatpush.bf16.msra.mxu0 %v1115
      %1131 = vmatpush.bf16.msra.mxu0 %v1114
      %1132 = vmatpush.bf16.msra.mxu0 %v1113
      %1133 = vmatpush.bf16.msra.mxu0 %v1112
      %1134 = vmatpush.bf16.msra.mxu0 %v1111
      %1135 = vmatmul.bf16.gmra.mxu0 %v1054
      %v1136 = vpop.f32.mrf.mxu0
      %v1137 = vadd.f32 0.0, %v1136
      %v1138 = vpop.f32.mrf.mxu0
      %v1139 = vadd.f32 0.0, %v1138
      %1140 = vmatmul.bf16.gmra.mxu0 %v1055
      %v1141 = vpop.f32.mrf.mxu0
      %v1142 = vadd.f32 0.0, %v1141
      %v1143 = vpop.f32.mrf.mxu0
      %v1144 = vadd.f32 0.0, %v1143
      %1145 = vmatmul.bf16.gmra.mxu0 %v1056
      %v1146 = vpop.f32.mrf.mxu0
      %v1147 = vadd.f32 0.0, %v1146
      %v1148 = vpop.f32.mrf.mxu0
      %v1149 = vadd.f32 0.0, %v1148
      %1150 = vmatmul.bf16.gmra.mxu0 %v1057
      %v1151 = vpop.f32.mrf.mxu0
      %v1152 = vadd.f32 0.0, %v1151
      %v1153 = vpop.f32.mrf.mxu0
      %v1154 = vadd.f32 0.0, %v1153
      %1155 = vmatmul.bf16.gmra.mxu0 %v1058
      %v1156 = vpop.f32.mrf.mxu0
      %v1157 = vadd.f32 0.0, %v1156
      %v1158 = vpop.f32.mrf.mxu0
      %v1159 = vadd.f32 0.0, %v1158
      %1160 = vmatmul.bf16.gmra.mxu0 %v1059
      %v1161 = vpop.f32.mrf.mxu0
      %v1162 = vadd.f32 0.0, %v1161
      %v1163 = vpop.f32.mrf.mxu0
      %v1164 = vadd.f32 0.0, %v1163
      %1165 = vmatmul.bf16.gmra.mxu0 %v1060
      %v1166 = vpop.f32.mrf.mxu0
      %v1167 = vadd.f32 0.0, %v1166
      %v1168 = vpop.f32.mrf.mxu0
      %v1169 = vadd.f32 0.0, %v1168
      %1170 = vmatmul.bf16.gmra.mxu0 %v1061
      %v1171 = vpop.f32.mrf.mxu0
      %v1172 = vadd.f32 0.0, %v1171
      %v1173 = vpop.f32.mrf.mxu0
      %v1174 = vadd.f32 0.0, %v1173
      %1175 = vdwg.mxu0
      %vm1176 = vcmp.lt.s32.totalorder %v667, 15
      %vm1177 = vcmp.lt.s32.totalorder %v668, 15
      %vm1178 = vcmp.lt.s32.totalorder %v669, 15
      %vm1179 = vcmp.lt.s32.totalorder %v670, 15
      %vm1180 = vcmp.lt.s32.totalorder %v671, 15
      %vm1181 = vcmp.lt.s32.totalorder %v672, 15
      %vm1182 = vcmp.lt.s32.totalorder %v673, 15
      %vm1183 = vcmp.lt.s32.totalorder %v674, 15
      %vm1184 = vcmp.lt.s32.totalorder %v675, 15
      %vm1185 = vcmp.lt.s32.totalorder %v676, 15
      %vm1186 = vcmp.lt.s32.totalorder %v677, 15
      %vm1187 = vcmp.lt.s32.totalorder %v678, 15
      %vm1188 = vcmp.lt.s32.totalorder %v679, 15
      %vm1189 = vcmp.lt.s32.totalorder %v680, 15
      %vm1190 = vcmp.lt.s32.totalorder %v681, 15
      %vm1191 = vcmp.lt.s32.totalorder %v682, 15
      %v1192 = vsel %vm1176, 1, 0
      %v1193 = vsel %vm1177, 1, 0
      %v1194 = vsel %vm1178, 1, 0
      %v1195 = vsel %vm1179, 1, 0
      %v1196 = vsel %vm1180, 1, 0
      %v1197 = vsel %vm1181, 1, 0
      %v1198 = vsel %vm1182, 1, 0
      %v1199 = vsel %vm1183, 1, 0
      %v1200 = vsel %vm1184, 1, 0
      %v1201 = vsel %vm1185, 1, 0
      %v1202 = vsel %vm1186, 1, 0
      %v1203 = vsel %vm1187, 1, 0
      %v1204 = vsel %vm1188, 1, 0
      %v1205 = vsel %vm1189, 1, 0
      %v1206 = vsel %vm1190, 1, 0
      %v1207 = vsel %vm1191, 1, 0
      %vm1208 = vcmp.eq.s32.totalorder %v1192, 1
      %vm1209 = vcmp.eq.s32.totalorder %v1193, 1
      %vm1210 = vcmp.eq.s32.totalorder %v1194, 1
      %vm1211 = vcmp.eq.s32.totalorder %v1195, 1
      %vm1212 = vcmp.eq.s32.totalorder %v1196, 1
      %vm1213 = vcmp.eq.s32.totalorder %v1197, 1
      %vm1214 = vcmp.eq.s32.totalorder %v1198, 1
      %vm1215 = vcmp.eq.s32.totalorder %v1199, 1
      %vm1216 = vcmp.eq.s32.totalorder %v1200, 1
      %vm1217 = vcmp.eq.s32.totalorder %v1201, 1
      %vm1218 = vcmp.eq.s32.totalorder %v1202, 1
      %vm1219 = vcmp.eq.s32.totalorder %v1203, 1
      %vm1220 = vcmp.eq.s32.totalorder %v1204, 1
      %vm1221 = vcmp.eq.s32.totalorder %v1205, 1
      %vm1222 = vcmp.eq.s32.totalorder %v1206, 1
      %vm1223 = vcmp.eq.s32.totalorder %v1207, 1
      %v1224 = vsel %vm1208, %v1137, 0.0
      %v1225 = vsel %vm1209, %v1139, 0.0
      %v1226 = vsel %vm1210, %v1142, 0.0
      %v1227 = vsel %vm1211, %v1144, 0.0
      %v1228 = vsel %vm1212, %v1147, 0.0
      %v1229 = vsel %vm1213, %v1149, 0.0
      %v1230 = vsel %vm1214, %v1152, 0.0
      %v1231 = vsel %vm1215, %v1154, 0.0
      %v1232 = vsel %vm1216, %v1157, 0.0
      %v1233 = vsel %vm1217, %v1159, 0.0
      %v1234 = vsel %vm1218, %v1162, 0.0
      %v1235 = vsel %vm1219, %v1164, 0.0
      %v1236 = vsel %vm1220, %v1167, 0.0
      %v1237 = vsel %vm1221, %v1169, 0.0
      %v1238 = vsel %vm1222, %v1172, 0.0
      %v1239 = vsel %vm1223, %v1174, 0.0
      %v1240 = vadd.f32 %v1022, %v1224
      %v1241 = vadd.f32 %v1023, %v1225
      %v1242 = vadd.f32 %v1024, %v1226
      %v1243 = vadd.f32 %v1025, %v1227
      %v1244 = vadd.f32 %v1026, %v1228
      %v1245 = vadd.f32 %v1027, %v1229
      %v1246 = vadd.f32 %v1028, %v1230
      %v1247 = vadd.f32 %v1029, %v1231
      %v1248 = vadd.f32 %v1030, %v1232
      %v1249 = vadd.f32 %v1031, %v1233
      %v1250 = vadd.f32 %v1032, %v1234
      %v1251 = vadd.f32 %v1033, %v1235
      %v1252 = vadd.f32 %v1034, %v1236
      %v1253 = vadd.f32 %v1035, %v1237
      %v1254 = vadd.f32 %v1036, %v1238
      %v1255 = vadd.f32 %v1037, %v1239
      %v1256 = vld [vmem:[#allocation2 + $0x17] sm:$0xff]
      %v1257 = vld [vmem:[#allocation2 + $0x1f] sm:$0xff]
      %v1258 = vld [vmem:[#allocation2 + $0x27] sm:$0xff]
      %v1259 = vld [vmem:[#allocation2 + $0x2f] sm:$0xff]
      %v1260 = vld [vmem:[#allocation2 + $0x37] sm:$0xff]
      %v1261 = vld [vmem:[#allocation2 + $0x3f] sm:$0xff]
      %v1262 = vld [vmem:[#allocation2 + $0x47] sm:$0xff]
      %v1263 = vld [vmem:[#allocation2 + $0x4f] sm:$0xff]
      %v1264 = vld [vmem:[#allocation2 + $0x57] sm:$0xff]
      %v1265 = vld [vmem:[#allocation2 + $0x5f] sm:$0xff]
      %v1266 = vld [vmem:[#allocation2 + $0x67] sm:$0xff]
      %v1267 = vld [vmem:[#allocation2 + $0x6f] sm:$0xff]
      %v1268 = vld [vmem:[#allocation2 + $0x77] sm:$0xff]
      %v1269 = vld [vmem:[#allocation2 + $0x7f] sm:$0xff]
      %v1270 = vld [vmem:[#allocation2 + $0x87] sm:$0xff]
      %v1271 = vld [vmem:[#allocation2 + $0x8f] sm:$0xff]
      %v1272 = vpack.c.bf16 %v1257, %v1256
      %v1273 = vpack.c.bf16 %v1259, %v1258
      %v1274 = vpack.c.bf16 %v1261, %v1260
      %v1275 = vpack.c.bf16 %v1263, %v1262
      %v1276 = vpack.c.bf16 %v1265, %v1264
      %v1277 = vpack.c.bf16 %v1267, %v1266
      %v1278 = vpack.c.bf16 %v1269, %v1268
      %v1279 = vpack.c.bf16 %v1271, %v1270
      %s1280 = scalar_lea.vmem %s3, 192
      %v1281 = vld [vmem:[%s1280] sm:$0xf]
      %v1282 = vld [vmem:[%s1280 + $0x4] sm:$0xf]
      %v1283 = vld [vmem:[%s1280 + $0x8] sm:$0xf]
      %v1284 = vld [vmem:[%s1280 + $0xc] sm:$0xf]
      %v1285 = vld [vmem:[%s1280 + $0x10] sm:$0xf]
      %v1286 = vld [vmem:[%s1280 + $0x14] sm:$0xf]
      %v1287 = vld [vmem:[%s1280 + $0x18] sm:$0xf]
      %v1288 = vld [vmem:[%s1280 + $0x1c] sm:$0xf]
      %v1289 = vld [vmem:[%s1280 + $0x20] sm:$0xf]
      %v1290 = vld [vmem:[%s1280 + $0x24] sm:$0xf]
      %v1291 = vld [vmem:[%s1280 + $0x28] sm:$0xf]
      %v1292 = vld [vmem:[%s1280 + $0x2c] sm:$0xf]
      %v1293 = vld [vmem:[%s1280 + $0x30] sm:$0xf]
      %v1294 = vld [vmem:[%s1280 + $0x34] sm:$0xf]
      %v1295 = vld [vmem:[%s1280 + $0x38] sm:$0xf]
      %v1296 = vld [vmem:[%s1280 + $0x3c] sm:$0xf]
      %v1313 = vunpack.c.l.b16 %v1281
      %v1314 = vunpack.c.l.b16 %v1282
      %v1315 = vunpack.c.l.b16 %v1283
      %v1316 = vunpack.c.l.b16 %v1284
      %v1317 = vunpack.c.l.b16 %v1285
      %v1318 = vunpack.c.l.b16 %v1286
      %v1319 = vunpack.c.l.b16 %v1287
      %v1320 = vunpack.c.l.b16 %v1288
      %v1321 = vunpack.c.l.b16 %v1289
      %v1322 = vunpack.c.l.b16 %v1290
      %v1323 = vunpack.c.l.b16 %v1291
      %v1324 = vunpack.c.l.b16 %v1292
      %v1325 = vunpack.c.l.b16 %v1293
      %v1326 = vunpack.c.l.b16 %v1294
      %v1327 = vunpack.c.l.b16 %v1295
      %v1328 = vunpack.c.l.b16 %v1296
      %v1329 = vpack.c.b16 %v1314, %v1313
      %v1330 = vpack.c.b16 %v1316, %v1315
      %v1331 = vpack.c.b16 %v1318, %v1317
      %v1332 = vpack.c.b16 %v1320, %v1319
      %v1333 = vpack.c.b16 %v1322, %v1321
      %v1334 = vpack.c.b16 %v1324, %v1323
      %v1335 = vpack.c.b16 %v1326, %v1325
      %v1336 = vpack.c.b16 %v1328, %v1327
      %1345 = vmatpush.bf16.msra.mxu0 %v1336
      %1346 = vmatpush.bf16.msra.mxu0 %v1335
      %1347 = vmatpush.bf16.msra.mxu0 %v1334
      %1348 = vmatpush.bf16.msra.mxu0 %v1333
      %1349 = vmatpush.bf16.msra.mxu0 %v1332
      %1350 = vmatpush.bf16.msra.mxu0 %v1331
      %1351 = vmatpush.bf16.msra.mxu0 %v1330
      %1352 = vmatpush.bf16.msra.mxu0 %v1329
      %1353 = vmatmul.bf16.gmra.mxu0 %v1272
      %v1354 = vpop.f32.mrf.mxu0
      %v1355 = vadd.f32 0.0, %v1354
      %v1356 = vpop.f32.mrf.mxu0
      %v1357 = vadd.f32 0.0, %v1356
      %1358 = vmatmul.bf16.gmra.mxu0 %v1273
      %v1359 = vpop.f32.mrf.mxu0
      %v1360 = vadd.f32 0.0, %v1359
      %v1361 = vpop.f32.mrf.mxu0
      %v1362 = vadd.f32 0.0, %v1361
      %1363 = vmatmul.bf16.gmra.mxu0 %v1274
      %v1364 = vpop.f32.mrf.mxu0
      %v1365 = vadd.f32 0.0, %v1364
      %v1366 = vpop.f32.mrf.mxu0
      %v1367 = vadd.f32 0.0, %v1366
      %1368 = vmatmul.bf16.gmra.mxu0 %v1275
      %v1369 = vpop.f32.mrf.mxu0
      %v1370 = vadd.f32 0.0, %v1369
      %v1371 = vpop.f32.mrf.mxu0
      %v1372 = vadd.f32 0.0, %v1371
      %1373 = vmatmul.bf16.gmra.mxu0 %v1276
      %v1374 = vpop.f32.mrf.mxu0
      %v1375 = vadd.f32 0.0, %v1374
      %v1376 = vpop.f32.mrf.mxu0
      %v1377 = vadd.f32 0.0, %v1376
      %1378 = vmatmul.bf16.gmra.mxu0 %v1277
      %v1379 = vpop.f32.mrf.mxu0
      %v1380 = vadd.f32 0.0, %v1379
      %v1381 = vpop.f32.mrf.mxu0
      %v1382 = vadd.f32 0.0, %v1381
      %1383 = vmatmul.bf16.gmra.mxu0 %v1278
      %v1384 = vpop.f32.mrf.mxu0
      %v1385 = vadd.f32 0.0, %v1384
      %v1386 = vpop.f32.mrf.mxu0
      %v1387 = vadd.f32 0.0, %v1386
      %1388 = vmatmul.bf16.gmra.mxu0 %v1279
      %v1389 = vpop.f32.mrf.mxu0
      %v1390 = vadd.f32 0.0, %v1389
      %v1391 = vpop.f32.mrf.mxu0
      %v1392 = vadd.f32 0.0, %v1391
      %1393 = vdwg.mxu0
      %v1394 = vsel %vm852, %v1355, 0.0
      %v1395 = vsel %vm853, %v1357, 0.0
      %v1396 = vsel %vm854, %v1360, 0.0
      %v1397 = vsel %vm855, %v1362, 0.0
      %v1398 = vsel %vm856, %v1365, 0.0
      %v1399 = vsel %vm857, %v1367, 0.0
      %v1400 = vsel %vm858, %v1370, 0.0
      %v1401 = vsel %vm859, %v1372, 0.0
      %v1402 = vsel %vm860, %v1375, 0.0
      %v1403 = vsel %vm861, %v1377, 0.0
      %v1404 = vsel %vm862, %v1380, 0.0
      %v1405 = vsel %vm863, %v1382, 0.0
      %v1406 = vsel %vm864, %v1385, 0.0
      %v1407 = vsel %vm865, %v1387, 0.0
      %v1408 = vsel %vm866, %v1390, 0.0
      %v1409 = vsel %vm867, %v1392, 0.0
      %v1410 = vadd.f32 %v1240, %v1394
      %v1411 = vadd.f32 %v1241, %v1395
      %v1412 = vadd.f32 %v1242, %v1396
      %v1413 = vadd.f32 %v1243, %v1397
      %v1414 = vadd.f32 %v1244, %v1398
      %v1415 = vadd.f32 %v1245, %v1399
      %v1416 = vadd.f32 %v1246, %v1400
      %v1417 = vadd.f32 %v1247, %v1401
      %v1418 = vadd.f32 %v1248, %v1402
      %v1419 = vadd.f32 %v1249, %v1403
      %v1420 = vadd.f32 %v1250, %v1404
      %v1421 = vadd.f32 %v1251, %v1405
      %v1422 = vadd.f32 %v1252, %v1406
      %v1423 = vadd.f32 %v1253, %v1407
      %v1424 = vadd.f32 %v1254, %v1408
      %v1425 = vadd.f32 %v1255, %v1409
      %v1426 = vld [vmem:[#allocation2 + $0x18] sm:$0xff]
      %v1427 = vld [vmem:[#allocation2 + $0x20] sm:$0xff]
      %v1428 = vld [vmem:[#allocation2 + $0x28] sm:$0xff]
      %v1429 = vld [vmem:[#allocation2 + $0x30] sm:$0xff]
      %v1430 = vld [vmem:[#allocation2 + $0x38] sm:$0xff]
      %v1431 = vld [vmem:[#allocation2 + $0x40] sm:$0xff]
      %v1432 = vld [vmem:[#allocation2 + $0x48] sm:$0xff]
      %v1433 = vld [vmem:[#allocation2 + $0x50] sm:$0xff]
      %v1434 = vld [vmem:[#allocation2 + $0x58] sm:$0xff]
      %v1435 = vld [vmem:[#allocation2 + $0x60] sm:$0xff]
      %v1436 = vld [vmem:[#allocation2 + $0x68] sm:$0xff]
      %v1437 = vld [vmem:[#allocation2 + $0x70] sm:$0xff]
      %v1438 = vld [vmem:[#allocation2 + $0x78] sm:$0xff]
      %v1439 = vld [vmem:[#allocation2 + $0x80] sm:$0xff]
      %v1440 = vld [vmem:[#allocation2 + $0x88] sm:$0xff]
      %v1441 = vld [vmem:[#allocation2 + $0x90] sm:$0xff]
      %v1442 = vpack.c.bf16 %v1427, %v1426
      %v1443 = vpack.c.bf16 %v1429, %v1428
      %v1444 = vpack.c.bf16 %v1431, %v1430
      %v1445 = vpack.c.bf16 %v1433, %v1432
      %v1446 = vpack.c.bf16 %v1435, %v1434
      %v1447 = vpack.c.bf16 %v1437, %v1436
      %v1448 = vpack.c.bf16 %v1439, %v1438
      %v1449 = vpack.c.bf16 %v1441, %v1440
      %s1450 = scalar_lea.vmem %s3, 256
      %v1451 = vld [vmem:[%s1450] sm:$0xf]
      %v1452 = vld [vmem:[%s1450 + $0x4] sm:$0xf]
      %v1453 = vld [vmem:[%s1450 + $0x8] sm:$0xf]
      %v1454 = vld [vmem:[%s1450 + $0xc] sm:$0xf]
      %v1455 = vld [vmem:[%s1450 + $0x10] sm:$0xf]
      %v1456 = vld [vmem:[%s1450 + $0x14] sm:$0xf]
      %v1457 = vld [vmem:[%s1450 + $0x18] sm:$0xf]
      %v1458 = vld [vmem:[%s1450 + $0x1c] sm:$0xf]
      %v1459 = vld [vmem:[%s1450 + $0x20] sm:$0xf]
      %v1460 = vld [vmem:[%s1450 + $0x24] sm:$0xf]
      %v1461 = vld [vmem:[%s1450 + $0x28] sm:$0xf]
      %v1462 = vld [vmem:[%s1450 + $0x2c] sm:$0xf]
      %v1463 = vld [vmem:[%s1450 + $0x30] sm:$0xf]
      %v1464 = vld [vmem:[%s1450 + $0x34] sm:$0xf]
      %v1465 = vld [vmem:[%s1450 + $0x38] sm:$0xf]
      %v1466 = vld [vmem:[%s1450 + $0x3c] sm:$0xf]
      %v1483 = vunpack.c.l.b16 %v1451
      %v1484 = vunpack.c.l.b16 %v1452
      %v1485 = vunpack.c.l.b16 %v1453
      %v1486 = vunpack.c.l.b16 %v1454
      %v1487 = vunpack.c.l.b16 %v1455
      %v1488 = vunpack.c.l.b16 %v1456
      %v1489 = vunpack.c.l.b16 %v1457
      %v1490 = vunpack.c.l.b16 %v1458
      %v1491 = vunpack.c.l.b16 %v1459
      %v1492 = vunpack.c.l.b16 %v1460
      %v1493 = vunpack.c.l.b16 %v1461
      %v1494 = vunpack.c.l.b16 %v1462
      %v1495 = vunpack.c.l.b16 %v1463
      %v1496 = vunpack.c.l.b16 %v1464
      %v1497 = vunpack.c.l.b16 %v1465
      %v1498 = vunpack.c.l.b16 %v1466
      %v1499 = vpack.c.b16 %v1484, %v1483
      %v1500 = vpack.c.b16 %v1486, %v1485
      %v1501 = vpack.c.b16 %v1488, %v1487
      %v1502 = vpack.c.b16 %v1490, %v1489
      %v1503 = vpack.c.b16 %v1492, %v1491
      %v1504 = vpack.c.b16 %v1494, %v1493
      %v1505 = vpack.c.b16 %v1496, %v1495
      %v1506 = vpack.c.b16 %v1498, %v1497
      %1515 = vmatpush.bf16.msra.mxu0 %v1506
      %1516 = vmatpush.bf16.msra.mxu0 %v1505
      %1517 = vmatpush.bf16.msra.mxu0 %v1504
      %1518 = vmatpush.bf16.msra.mxu0 %v1503
      %1519 = vmatpush.bf16.msra.mxu0 %v1502
      %1520 = vmatpush.bf16.msra.mxu0 %v1501
      %1521 = vmatpush.bf16.msra.mxu0 %v1500
      %1522 = vmatpush.bf16.msra.mxu0 %v1499
      %1523 = vmatmul.bf16.gmra.mxu0 %v1442
      %v1524 = vpop.f32.mrf.mxu0
      %v1525 = vadd.f32 0.0, %v1524
      %v1526 = vpop.f32.mrf.mxu0
      %v1527 = vadd.f32 0.0, %v1526
      %1528 = vmatmul.bf16.gmra.mxu0 %v1443
      %v1529 = vpop.f32.mrf.mxu0
      %v1530 = vadd.f32 0.0, %v1529
      %v1531 = vpop.f32.mrf.mxu0
      %v1532 = vadd.f32 0.0, %v1531
      %1533 = vmatmul.bf16.gmra.mxu0 %v1444
      %v1534 = vpop.f32.mrf.mxu0
      %v1535 = vadd.f32 0.0, %v1534
      %v1536 = vpop.f32.mrf.mxu0
      %v1537 = vadd.f32 0.0, %v1536
      %1538 = vmatmul.bf16.gmra.mxu0 %v1445
      %v1539 = vpop.f32.mrf.mxu0
      %v1540 = vadd.f32 0.0, %v1539
      %v1541 = vpop.f32.mrf.mxu0
      %v1542 = vadd.f32 0.0, %v1541
      %1543 = vmatmul.bf16.gmra.mxu0 %v1446
      %v1544 = vpop.f32.mrf.mxu0
      %v1545 = vadd.f32 0.0, %v1544
      %v1546 = vpop.f32.mrf.mxu0
      %v1547 = vadd.f32 0.0, %v1546
      %1548 = vmatmul.bf16.gmra.mxu0 %v1447
      %v1549 = vpop.f32.mrf.mxu0
      %v1550 = vadd.f32 0.0, %v1549
      %v1551 = vpop.f32.mrf.mxu0
      %v1552 = vadd.f32 0.0, %v1551
      %1553 = vmatmul.bf16.gmra.mxu0 %v1448
      %v1554 = vpop.f32.mrf.mxu0
      %v1555 = vadd.f32 0.0, %v1554
      %v1556 = vpop.f32.mrf.mxu0
      %v1557 = vadd.f32 0.0, %v1556
      %1558 = vmatmul.bf16.gmra.mxu0 %v1449
      %v1559 = vpop.f32.mrf.mxu0
      %v1560 = vadd.f32 0.0, %v1559
      %v1561 = vpop.f32.mrf.mxu0
      %v1562 = vadd.f32 0.0, %v1561
      %1563 = vdwg.mxu0
      %v1564 = vadd.f32 %v1410, %v1525
      %v1565 = vadd.f32 %v1411, %v1527
      %v1566 = vadd.f32 %v1412, %v1530
      %v1567 = vadd.f32 %v1413, %v1532
      %v1568 = vadd.f32 %v1414, %v1535
      %v1569 = vadd.f32 %v1415, %v1537
      %v1570 = vadd.f32 %v1416, %v1540
      %v1571 = vadd.f32 %v1417, %v1542
      %v1572 = vadd.f32 %v1418, %v1545
      %v1573 = vadd.f32 %v1419, %v1547
      %v1574 = vadd.f32 %v1420, %v1550
      %v1575 = vadd.f32 %v1421, %v1552
      %v1576 = vadd.f32 %v1422, %v1555
      %v1577 = vadd.f32 %v1423, %v1557
      %v1578 = vadd.f32 %v1424, %v1560
      %v1579 = vadd.f32 %v1425, %v1562
      %v1580 = vld [vmem:[#allocation2 + $0x19] sm:$0xff]
      %v1581 = vld [vmem:[#allocation2 + $0x21] sm:$0xff]
      %v1582 = vld [vmem:[#allocation2 + $0x29] sm:$0xff]
      %v1583 = vld [vmem:[#allocation2 + $0x31] sm:$0xff]
      %v1584 = vld [vmem:[#allocation2 + $0x39] sm:$0xff]
      %v1585 = vld [vmem:[#allocation2 + $0x41] sm:$0xff]
      %v1586 = vld [vmem:[#allocation2 + $0x49] sm:$0xff]
      %v1587 = vld [vmem:[#allocation2 + $0x51] sm:$0xff]
      %v1588 = vld [vmem:[#allocation2 + $0x59] sm:$0xff]
      %v1589 = vld [vmem:[#allocation2 + $0x61] sm:$0xff]
      %v1590 = vld [vmem:[#allocation2 + $0x69] sm:$0xff]
      %v1591 = vld [vmem:[#allocation2 + $0x71] sm:$0xff]
      %v1592 = vld [vmem:[#allocation2 + $0x79] sm:$0xff]
      %v1593 = vld [vmem:[#allocation2 + $0x81] sm:$0xff]
      %v1594 = vld [vmem:[#allocation2 + $0x89] sm:$0xff]
      %v1595 = vld [vmem:[#allocation2 + $0x91] sm:$0xff]
      %v1596 = vpack.c.bf16 %v1581, %v1580
      %v1597 = vpack.c.bf16 %v1583, %v1582
      %v1598 = vpack.c.bf16 %v1585, %v1584
      %v1599 = vpack.c.bf16 %v1587, %v1586
      %v1600 = vpack.c.bf16 %v1589, %v1588
      %v1601 = vpack.c.bf16 %v1591, %v1590
      %v1602 = vpack.c.bf16 %v1593, %v1592
      %v1603 = vpack.c.bf16 %v1595, %v1594
      %s1604 = scalar_lea.vmem %s3, 320
      %v1605 = vld [vmem:[%s1604] sm:$0xf]
      %v1606 = vld [vmem:[%s1604 + $0x4] sm:$0xf]
      %v1607 = vld [vmem:[%s1604 + $0x8] sm:$0xf]
      %v1608 = vld [vmem:[%s1604 + $0xc] sm:$0xf]
      %v1609 = vld [vmem:[%s1604 + $0x10] sm:$0xf]
      %v1610 = vld [vmem:[%s1604 + $0x14] sm:$0xf]
      %v1611 = vld [vmem:[%s1604 + $0x18] sm:$0xf]
      %v1612 = vld [vmem:[%s1604 + $0x1c] sm:$0xf]
      %v1613 = vld [vmem:[%s1604 + $0x20] sm:$0xf]
      %v1614 = vld [vmem:[%s1604 + $0x24] sm:$0xf]
      %v1615 = vld [vmem:[%s1604 + $0x28] sm:$0xf]
      %v1616 = vld [vmem:[%s1604 + $0x2c] sm:$0xf]
      %v1617 = vld [vmem:[%s1604 + $0x30] sm:$0xf]
      %v1618 = vld [vmem:[%s1604 + $0x34] sm:$0xf]
      %v1619 = vld [vmem:[%s1604 + $0x38] sm:$0xf]
      %v1620 = vld [vmem:[%s1604 + $0x3c] sm:$0xf]
      %v1637 = vunpack.c.l.b16 %v1605
      %v1638 = vunpack.c.l.b16 %v1606
      %v1639 = vunpack.c.l.b16 %v1607
      %v1640 = vunpack.c.l.b16 %v1608
      %v1641 = vunpack.c.l.b16 %v1609
      %v1642 = vunpack.c.l.b16 %v1610
      %v1643 = vunpack.c.l.b16 %v1611
      %v1644 = vunpack.c.l.b16 %v1612
      %v1645 = vunpack.c.l.b16 %v1613
      %v1646 = vunpack.c.l.b16 %v1614
      %v1647 = vunpack.c.l.b16 %v1615
      %v1648 = vunpack.c.l.b16 %v1616
      %v1649 = vunpack.c.l.b16 %v1617
      %v1650 = vunpack.c.l.b16 %v1618
      %v1651 = vunpack.c.l.b16 %v1619
      %v1652 = vunpack.c.l.b16 %v1620
      %v1653 = vpack.c.b16 %v1638, %v1637
      %v1654 = vpack.c.b16 %v1640, %v1639
      %v1655 = vpack.c.b16 %v1642, %v1641
      %v1656 = vpack.c.b16 %v1644, %v1643
      %v1657 = vpack.c.b16 %v1646, %v1645
      %v1658 = vpack.c.b16 %v1648, %v1647
      %v1659 = vpack.c.b16 %v1650, %v1649
      %v1660 = vpack.c.b16 %v1652, %v1651
      %1669 = vmatpush.bf16.msra.mxu0 %v1660
      %1670 = vmatpush.bf16.msra.mxu0 %v1659
      %1671 = vmatpush.bf16.msra.mxu0 %v1658
      %1672 = vmatpush.bf16.msra.mxu0 %v1657
      %1673 = vmatpush.bf16.msra.mxu0 %v1656
      %1674 = vmatpush.bf16.msra.mxu0 %v1655
      %1675 = vmatpush.bf16.msra.mxu0 %v1654
      %1676 = vmatpush.bf16.msra.mxu0 %v1653
      %1677 = vmatmul.bf16.gmra.mxu0 %v1596
      %v1678 = vpop.f32.mrf.mxu0
      %v1679 = vadd.f32 0.0, %v1678
      %v1680 = vpop.f32.mrf.mxu0
      %v1681 = vadd.f32 0.0, %v1680
      %1682 = vmatmul.bf16.gmra.mxu0 %v1597
      %v1683 = vpop.f32.mrf.mxu0
      %v1684 = vadd.f32 0.0, %v1683
      %v1685 = vpop.f32.mrf.mxu0
      %v1686 = vadd.f32 0.0, %v1685
      %1687 = vmatmul.bf16.gmra.mxu0 %v1598
      %v1688 = vpop.f32.mrf.mxu0
      %v1689 = vadd.f32 0.0, %v1688
      %v1690 = vpop.f32.mrf.mxu0
      %v1691 = vadd.f32 0.0, %v1690
      %1692 = vmatmul.bf16.gmra.mxu0 %v1599
      %v1693 = vpop.f32.mrf.mxu0
      %v1694 = vadd.f32 0.0, %v1693
      %v1695 = vpop.f32.mrf.mxu0
      %v1696 = vadd.f32 0.0, %v1695
      %1697 = vmatmul.bf16.gmra.mxu0 %v1600
      %v1698 = vpop.f32.mrf.mxu0
      %v1699 = vadd.f32 0.0, %v1698
      %v1700 = vpop.f32.mrf.mxu0
      %v1701 = vadd.f32 0.0, %v1700
      %1702 = vmatmul.bf16.gmra.mxu0 %v1601
      %v1703 = vpop.f32.mrf.mxu0
      %v1704 = vadd.f32 0.0, %v1703
      %v1705 = vpop.f32.mrf.mxu0
      %v1706 = vadd.f32 0.0, %v1705
      %1707 = vmatmul.bf16.gmra.mxu0 %v1602
      %v1708 = vpop.f32.mrf.mxu0
      %v1709 = vadd.f32 0.0, %v1708
      %v1710 = vpop.f32.mrf.mxu0
      %v1711 = vadd.f32 0.0, %v1710
      %1712 = vmatmul.bf16.gmra.mxu0 %v1603
      %v1713 = vpop.f32.mrf.mxu0
      %v1714 = vadd.f32 0.0, %v1713
      %v1715 = vpop.f32.mrf.mxu0
      %v1716 = vadd.f32 0.0, %v1715
      %1717 = vdwg.mxu0
      %v1718 = vsel %vm1208, %v1679, 0.0
      %v1719 = vsel %vm1209, %v1681, 0.0
      %v1720 = vsel %vm1210, %v1684, 0.0
      %v1721 = vsel %vm1211, %v1686, 0.0
      %v1722 = vsel %vm1212, %v1689, 0.0
      %v1723 = vsel %vm1213, %v1691, 0.0
      %v1724 = vsel %vm1214, %v1694, 0.0
      %v1725 = vsel %vm1215, %v1696, 0.0
      %v1726 = vsel %vm1216, %v1699, 0.0
      %v1727 = vsel %vm1217, %v1701, 0.0
      %v1728 = vsel %vm1218, %v1704, 0.0
      %v1729 = vsel %vm1219, %v1706, 0.0
      %v1730 = vsel %vm1220, %v1709, 0.0
      %v1731 = vsel %vm1221, %v1711, 0.0
      %v1732 = vsel %vm1222, %v1714, 0.0
      %v1733 = vsel %vm1223, %v1716, 0.0
      %v1734 = vadd.f32 %v1564, %v1718
      %v1735 = vadd.f32 %v1565, %v1719
      %v1736 = vadd.f32 %v1566, %v1720
      %v1737 = vadd.f32 %v1567, %v1721
      %v1738 = vadd.f32 %v1568, %v1722
      %v1739 = vadd.f32 %v1569, %v1723
      %v1740 = vadd.f32 %v1570, %v1724
      %v1741 = vadd.f32 %v1571, %v1725
      %v1742 = vadd.f32 %v1572, %v1726
      %v1743 = vadd.f32 %v1573, %v1727
      %v1744 = vadd.f32 %v1574, %v1728
      %v1745 = vadd.f32 %v1575, %v1729
      %v1746 = vadd.f32 %v1576, %v1730
      %v1747 = vadd.f32 %v1577, %v1731
      %v1748 = vadd.f32 %v1578, %v1732
      %v1749 = vadd.f32 %v1579, %v1733
      %v1750 = vld [vmem:[#allocation2 + $0x27] sm:$0xff]
      %v1751 = vld [vmem:[#allocation2 + $0x2f] sm:$0xff]
      %v1752 = vld [vmem:[#allocation2 + $0x37] sm:$0xff]
      %v1753 = vld [vmem:[#allocation2 + $0x3f] sm:$0xff]
      %v1754 = vld [vmem:[#allocation2 + $0x47] sm:$0xff]
      %v1755 = vld [vmem:[#allocation2 + $0x4f] sm:$0xff]
      %v1756 = vld [vmem:[#allocation2 + $0x57] sm:$0xff]
      %v1757 = vld [vmem:[#allocation2 + $0x5f] sm:$0xff]
      %v1758 = vld [vmem:[#allocation2 + $0x67] sm:$0xff]
      %v1759 = vld [vmem:[#allocation2 + $0x6f] sm:$0xff]
      %v1760 = vld [vmem:[#allocation2 + $0x77] sm:$0xff]
      %v1761 = vld [vmem:[#allocation2 + $0x7f] sm:$0xff]
      %v1762 = vld [vmem:[#allocation2 + $0x87] sm:$0xff]
      %v1763 = vld [vmem:[#allocation2 + $0x8f] sm:$0xff]
      %v1764 = vld [vmem:[#allocation2 + $0x97] sm:$0xff]
      %v1765 = vld [vmem:[#allocation2 + $0x9f] sm:$0xff]
      %v1766 = vpack.c.bf16 %v1751, %v1750
      %v1767 = vpack.c.bf16 %v1753, %v1752
      %v1768 = vpack.c.bf16 %v1755, %v1754
      %v1769 = vpack.c.bf16 %v1757, %v1756
      %v1770 = vpack.c.bf16 %v1759, %v1758
      %v1771 = vpack.c.bf16 %v1761, %v1760
      %v1772 = vpack.c.bf16 %v1763, %v1762
      %v1773 = vpack.c.bf16 %v1765, %v1764
      %s1774 = scalar_lea.vmem %s3, 384
      %v1775 = vld [vmem:[%s1774] sm:$0xf]
      %v1776 = vld [vmem:[%s1774 + $0x4] sm:$0xf]
      %v1777 = vld [vmem:[%s1774 + $0x8] sm:$0xf]
      %v1778 = vld [vmem:[%s1774 + $0xc] sm:$0xf]
      %v1779 = vld [vmem:[%s1774 + $0x10] sm:$0xf]
      %v1780 = vld [vmem:[%s1774 + $0x14] sm:$0xf]
      %v1781 = vld [vmem:[%s1774 + $0x18] sm:$0xf]
      %v1782 = vld [vmem:[%s1774 + $0x1c] sm:$0xf]
      %v1783 = vld [vmem:[%s1774 + $0x20] sm:$0xf]
      %v1784 = vld [vmem:[%s1774 + $0x24] sm:$0xf]
      %v1785 = vld [vmem:[%s1774 + $0x28] sm:$0xf]
      %v1786 = vld [vmem:[%s1774 + $0x2c] sm:$0xf]
      %v1787 = vld [vmem:[%s1774 + $0x30] sm:$0xf]
      %v1788 = vld [vmem:[%s1774 + $0x34] sm:$0xf]
      %v1789 = vld [vmem:[%s1774 + $0x38] sm:$0xf]
      %v1790 = vld [vmem:[%s1774 + $0x3c] sm:$0xf]
      %v1807 = vunpack.c.l.b16 %v1775
      %v1808 = vunpack.c.l.b16 %v1776
      %v1809 = vunpack.c.l.b16 %v1777
      %v1810 = vunpack.c.l.b16 %v1778
      %v1811 = vunpack.c.l.b16 %v1779
      %v1812 = vunpack.c.l.b16 %v1780
      %v1813 = vunpack.c.l.b16 %v1781
      %v1814 = vunpack.c.l.b16 %v1782
      %v1815 = vunpack.c.l.b16 %v1783
      %v1816 = vunpack.c.l.b16 %v1784
      %v1817 = vunpack.c.l.b16 %v1785
      %v1818 = vunpack.c.l.b16 %v1786
      %v1819 = vunpack.c.l.b16 %v1787
      %v1820 = vunpack.c.l.b16 %v1788
      %v1821 = vunpack.c.l.b16 %v1789
      %v1822 = vunpack.c.l.b16 %v1790
      %v1823 = vpack.c.b16 %v1808, %v1807
      %v1824 = vpack.c.b16 %v1810, %v1809
      %v1825 = vpack.c.b16 %v1812, %v1811
      %v1826 = vpack.c.b16 %v1814, %v1813
      %v1827 = vpack.c.b16 %v1816, %v1815
      %v1828 = vpack.c.b16 %v1818, %v1817
      %v1829 = vpack.c.b16 %v1820, %v1819
      %v1830 = vpack.c.b16 %v1822, %v1821
      %1839 = vmatpush.bf16.msra.mxu0 %v1830
      %1840 = vmatpush.bf16.msra.mxu0 %v1829
      %1841 = vmatpush.bf16.msra.mxu0 %v1828
      %1842 = vmatpush.bf16.msra.mxu0 %v1827
      %1843 = vmatpush.bf16.msra.mxu0 %v1826
      %1844 = vmatpush.bf16.msra.mxu0 %v1825
      %1845 = vmatpush.bf16.msra.mxu0 %v1824
      %1846 = vmatpush.bf16.msra.mxu0 %v1823
      %1847 = vmatmul.bf16.gmra.mxu0 %v1766
      %v1848 = vpop.f32.mrf.mxu0
      %v1849 = vadd.f32 0.0, %v1848
      %v1850 = vpop.f32.mrf.mxu0
      %v1851 = vadd.f32 0.0, %v1850
      %1852 = vmatmul.bf16.gmra.mxu0 %v1767
      %v1853 = vpop.f32.mrf.mxu0
      %v1854 = vadd.f32 0.0, %v1853
      %v1855 = vpop.f32.mrf.mxu0
      %v1856 = vadd.f32 0.0, %v1855
      %1857 = vmatmul.bf16.gmra.mxu0 %v1768
      %v1858 = vpop.f32.mrf.mxu0
      %v1859 = vadd.f32 0.0, %v1858
      %v1860 = vpop.f32.mrf.mxu0
      %v1861 = vadd.f32 0.0, %v1860
      %1862 = vmatmul.bf16.gmra.mxu0 %v1769
      %v1863 = vpop.f32.mrf.mxu0
      %v1864 = vadd.f32 0.0, %v1863
      %v1865 = vpop.f32.mrf.mxu0
      %v1866 = vadd.f32 0.0, %v1865
      %1867 = vmatmul.bf16.gmra.mxu0 %v1770
      %v1868 = vpop.f32.mrf.mxu0
      %v1869 = vadd.f32 0.0, %v1868
      %v1870 = vpop.f32.mrf.mxu0
      %v1871 = vadd.f32 0.0, %v1870
      %1872 = vmatmul.bf16.gmra.mxu0 %v1771
      %v1873 = vpop.f32.mrf.mxu0
      %v1874 = vadd.f32 0.0, %v1873
      %v1875 = vpop.f32.mrf.mxu0
      %v1876 = vadd.f32 0.0, %v1875
      %1877 = vmatmul.bf16.gmra.mxu0 %v1772
      %v1878 = vpop.f32.mrf.mxu0
      %v1879 = vadd.f32 0.0, %v1878
      %v1880 = vpop.f32.mrf.mxu0
      %v1881 = vadd.f32 0.0, %v1880
      %1882 = vmatmul.bf16.gmra.mxu0 %v1773
      %v1883 = vpop.f32.mrf.mxu0
      %v1884 = vadd.f32 0.0, %v1883
      %v1885 = vpop.f32.mrf.mxu0
      %v1886 = vadd.f32 0.0, %v1885
      %1887 = vdwg.mxu0
      %v1888 = vsel %vm852, %v1849, 0.0
      %v1889 = vsel %vm853, %v1851, 0.0
      %v1890 = vsel %vm854, %v1854, 0.0
      %v1891 = vsel %vm855, %v1856, 0.0
      %v1892 = vsel %vm856, %v1859, 0.0
      %v1893 = vsel %vm857, %v1861, 0.0
      %v1894 = vsel %vm858, %v1864, 0.0
      %v1895 = vsel %vm859, %v1866, 0.0
      %v1896 = vsel %vm860, %v1869, 0.0
      %v1897 = vsel %vm861, %v1871, 0.0
      %v1898 = vsel %vm862, %v1874, 0.0
      %v1899 = vsel %vm863, %v1876, 0.0
      %v1900 = vsel %vm864, %v1879, 0.0
      %v1901 = vsel %vm865, %v1881, 0.0
      %v1902 = vsel %vm866, %v1884, 0.0
      %v1903 = vsel %vm867, %v1886, 0.0
      %v1904 = vadd.f32 %v1734, %v1888
      %v1905 = vadd.f32 %v1735, %v1889
      %v1906 = vadd.f32 %v1736, %v1890
      %v1907 = vadd.f32 %v1737, %v1891
      %v1908 = vadd.f32 %v1738, %v1892
      %v1909 = vadd.f32 %v1739, %v1893
      %v1910 = vadd.f32 %v1740, %v1894
      %v1911 = vadd.f32 %v1741, %v1895
      %v1912 = vadd.f32 %v1742, %v1896
      %v1913 = vadd.f32 %v1743, %v1897
      %v1914 = vadd.f32 %v1744, %v1898
      %v1915 = vadd.f32 %v1745, %v1899
      %v1916 = vadd.f32 %v1746, %v1900
      %v1917 = vadd.f32 %v1747, %v1901
      %v1918 = vadd.f32 %v1748, %v1902
      %v1919 = vadd.f32 %v1749, %v1903
      %v1920 = vld [vmem:[#allocation2 + $0x28] sm:$0xff]
      %v1921 = vld [vmem:[#allocation2 + $0x30] sm:$0xff]
      %v1922 = vld [vmem:[#allocation2 + $0x38] sm:$0xff]
      %v1923 = vld [vmem:[#allocation2 + $0x40] sm:$0xff]
      %v1924 = vld [vmem:[#allocation2 + $0x48] sm:$0xff]
      %v1925 = vld [vmem:[#allocation2 + $0x50] sm:$0xff]
      %v1926 = vld [vmem:[#allocation2 + $0x58] sm:$0xff]
      %v1927 = vld [vmem:[#allocation2 + $0x60] sm:$0xff]
      %v1928 = vld [vmem:[#allocation2 + $0x68] sm:$0xff]
      %v1929 = vld [vmem:[#allocation2 + $0x70] sm:$0xff]
      %v1930 = vld [vmem:[#allocation2 + $0x78] sm:$0xff]
      %v1931 = vld [vmem:[#allocation2 + $0x80] sm:$0xff]
      %v1932 = vld [vmem:[#allocation2 + $0x88] sm:$0xff]
      %v1933 = vld [vmem:[#allocation2 + $0x90] sm:$0xff]
      %v1934 = vld [vmem:[#allocation2 + $0x98] sm:$0xff]
      %v1935 = vld [vmem:[#allocation2 + $0xa0] sm:$0xff]
      %v1936 = vpack.c.bf16 %v1921, %v1920
      %v1937 = vpack.c.bf16 %v1923, %v1922
      %v1938 = vpack.c.bf16 %v1925, %v1924
      %v1939 = vpack.c.bf16 %v1927, %v1926
      %v1940 = vpack.c.bf16 %v1929, %v1928
      %v1941 = vpack.c.bf16 %v1931, %v1930
      %v1942 = vpack.c.bf16 %v1933, %v1932
      %v1943 = vpack.c.bf16 %v1935, %v1934
      %s1944 = scalar_lea.vmem %s3, 448
      %v1945 = vld [vmem:[%s1944] sm:$0xf]
      %v1946 = vld [vmem:[%s1944 + $0x4] sm:$0xf]
      %v1947 = vld [vmem:[%s1944 + $0x8] sm:$0xf]
      %v1948 = vld [vmem:[%s1944 + $0xc] sm:$0xf]
      %v1949 = vld [vmem:[%s1944 + $0x10] sm:$0xf]
      %v1950 = vld [vmem:[%s1944 + $0x14] sm:$0xf]
      %v1951 = vld [vmem:[%s1944 + $0x18] sm:$0xf]
      %v1952 = vld [vmem:[%s1944 + $0x1c] sm:$0xf]
      %v1953 = vld [vmem:[%s1944 + $0x20] sm:$0xf]
      %v1954 = vld [vmem:[%s1944 + $0x24] sm:$0xf]
      %v1955 = vld [vmem:[%s1944 + $0x28] sm:$0xf]
      %v1956 = vld [vmem:[%s1944 + $0x2c] sm:$0xf]
      %v1957 = vld [vmem:[%s1944 + $0x30] sm:$0xf]
      %v1958 = vld [vmem:[%s1944 + $0x34] sm:$0xf]
      %v1959 = vld [vmem:[%s1944 + $0x38] sm:$0xf]
      %v1960 = vld [vmem:[%s1944 + $0x3c] sm:$0xf]
      %v1977 = vunpack.c.l.b16 %v1945
      %v1978 = vunpack.c.l.b16 %v1946
      %v1979 = vunpack.c.l.b16 %v1947
      %v1980 = vunpack.c.l.b16 %v1948
      %v1981 = vunpack.c.l.b16 %v1949
      %v1982 = vunpack.c.l.b16 %v1950
      %v1983 = vunpack.c.l.b16 %v1951
      %v1984 = vunpack.c.l.b16 %v1952
      %v1985 = vunpack.c.l.b16 %v1953
      %v1986 = vunpack.c.l.b16 %v1954
      %v1987 = vunpack.c.l.b16 %v1955
      %v1988 = vunpack.c.l.b16 %v1956
      %v1989 = vunpack.c.l.b16 %v1957
      %v1990 = vunpack.c.l.b16 %v1958
      %v1991 = vunpack.c.l.b16 %v1959
      %v1992 = vunpack.c.l.b16 %v1960
      %v1993 = vpack.c.b16 %v1978, %v1977
      %v1994 = vpack.c.b16 %v1980, %v1979
      %v1995 = vpack.c.b16 %v1982, %v1981
      %v1996 = vpack.c.b16 %v1984, %v1983
      %v1997 = vpack.c.b16 %v1986, %v1985
      %v1998 = vpack.c.b16 %v1988, %v1987
      %v1999 = vpack.c.b16 %v1990, %v1989
      %v2000 = vpack.c.b16 %v1992, %v1991
      %2009 = vmatpush.bf16.msra.mxu0 %v2000
      %2010 = vmatpush.bf16.msra.mxu0 %v1999
      %2011 = vmatpush.bf16.msra.mxu0 %v1998
      %2012 = vmatpush.bf16.msra.mxu0 %v1997
      %2013 = vmatpush.bf16.msra.mxu0 %v1996
      %2014 = vmatpush.bf16.msra.mxu0 %v1995
      %2015 = vmatpush.bf16.msra.mxu0 %v1994
      %2016 = vmatpush.bf16.msra.mxu0 %v1993
      %2017 = vmatmul.bf16.gmra.mxu0 %v1936
      %v2018 = vpop.f32.mrf.mxu0
      %v2019 = vadd.f32 0.0, %v2018
      %v2020 = vpop.f32.mrf.mxu0
      %v2021 = vadd.f32 0.0, %v2020
      %2022 = vmatmul.bf16.gmra.mxu0 %v1937
      %v2023 = vpop.f32.mrf.mxu0
      %v2024 = vadd.f32 0.0, %v2023
      %v2025 = vpop.f32.mrf.mxu0
      %v2026 = vadd.f32 0.0, %v2025
      %2027 = vmatmul.bf16.gmra.mxu0 %v1938
      %v2028 = vpop.f32.mrf.mxu0
      %v2029 = vadd.f32 0.0, %v2028
      %v2030 = vpop.f32.mrf.mxu0
      %v2031 = vadd.f32 0.0, %v2030
      %2032 = vmatmul.bf16.gmra.mxu0 %v1939
      %v2033 = vpop.f32.mrf.mxu0
      %v2034 = vadd.f32 0.0, %v2033
      %v2035 = vpop.f32.mrf.mxu0
      %v2036 = vadd.f32 0.0, %v2035
      %2037 = vmatmul.bf16.gmra.mxu0 %v1940
      %v2038 = vpop.f32.mrf.mxu0
      %v2039 = vadd.f32 0.0, %v2038
      %v2040 = vpop.f32.mrf.mxu0
      %v2041 = vadd.f32 0.0, %v2040
      %2042 = vmatmul.bf16.gmra.mxu0 %v1941
      %v2043 = vpop.f32.mrf.mxu0
      %v2044 = vadd.f32 0.0, %v2043
      %v2045 = vpop.f32.mrf.mxu0
      %v2046 = vadd.f32 0.0, %v2045
      %2047 = vmatmul.bf16.gmra.mxu0 %v1942
      %v2048 = vpop.f32.mrf.mxu0
      %v2049 = vadd.f32 0.0, %v2048
      %v2050 = vpop.f32.mrf.mxu0
      %v2051 = vadd.f32 0.0, %v2050
      %2052 = vmatmul.bf16.gmra.mxu0 %v1943
      %v2053 = vpop.f32.mrf.mxu0
      %v2054 = vadd.f32 0.0, %v2053
      %v2055 = vpop.f32.mrf.mxu0
      %v2056 = vadd.f32 0.0, %v2055
      %2057 = vdwg.mxu0
      %v2058 = vadd.f32 %v1904, %v2019
      %v2059 = vadd.f32 %v1905, %v2021
      %v2060 = vadd.f32 %v1906, %v2024
      %v2061 = vadd.f32 %v1907, %v2026
      %v2062 = vadd.f32 %v1908, %v2029
      %v2063 = vadd.f32 %v1909, %v2031
      %v2064 = vadd.f32 %v1910, %v2034
      %v2065 = vadd.f32 %v1911, %v2036
      %v2066 = vadd.f32 %v1912, %v2039
      %v2067 = vadd.f32 %v1913, %v2041
      %v2068 = vadd.f32 %v1914, %v2044
      %v2069 = vadd.f32 %v1915, %v2046
      %v2070 = vadd.f32 %v1916, %v2049
      %v2071 = vadd.f32 %v1917, %v2051
      %v2072 = vadd.f32 %v1918, %v2054
      %v2073 = vadd.f32 %v1919, %v2056
      %v2074 = vld [vmem:[#allocation2 + $0x29] sm:$0xff]
      %v2075 = vld [vmem:[#allocation2 + $0x31] sm:$0xff]
      %v2076 = vld [vmem:[#allocation2 + $0x39] sm:$0xff]
      %v2077 = vld [vmem:[#allocation2 + $0x41] sm:$0xff]
      %v2078 = vld [vmem:[#allocation2 + $0x49] sm:$0xff]
      %v2079 = vld [vmem:[#allocation2 + $0x51] sm:$0xff]
      %v2080 = vld [vmem:[#allocation2 + $0x59] sm:$0xff]
      %v2081 = vld [vmem:[#allocation2 + $0x61] sm:$0xff]
      %v2082 = vld [vmem:[#allocation2 + $0x69] sm:$0xff]
      %v2083 = vld [vmem:[#allocation2 + $0x71] sm:$0xff]
      %v2084 = vld [vmem:[#allocation2 + $0x79] sm:$0xff]
      %v2085 = vld [vmem:[#allocation2 + $0x81] sm:$0xff]
      %v2086 = vld [vmem:[#allocation2 + $0x89] sm:$0xff]
      %v2087 = vld [vmem:[#allocation2 + $0x91] sm:$0xff]
      %v2088 = vld [vmem:[#allocation2 + $0x99] sm:$0xff]
      %v2089 = vld [vmem:[#allocation2 + $0xa1] sm:$0xff]
      %v2090 = vpack.c.bf16 %v2075, %v2074
      %v2091 = vpack.c.bf16 %v2077, %v2076
      %v2092 = vpack.c.bf16 %v2079, %v2078
      %v2093 = vpack.c.bf16 %v2081, %v2080
      %v2094 = vpack.c.bf16 %v2083, %v2082
      %v2095 = vpack.c.bf16 %v2085, %v2084
      %v2096 = vpack.c.bf16 %v2087, %v2086
      %v2097 = vpack.c.bf16 %v2089, %v2088
      %s2098 = scalar_lea.vmem %s3, 512
      %v2099 = vld [vmem:[%s2098] sm:$0xf]
      %v2100 = vld [vmem:[%s2098 + $0x4] sm:$0xf]
      %v2101 = vld [vmem:[%s2098 + $0x8] sm:$0xf]
      %v2102 = vld [vmem:[%s2098 + $0xc] sm:$0xf]
      %v2103 = vld [vmem:[%s2098 + $0x10] sm:$0xf]
      %v2104 = vld [vmem:[%s2098 + $0x14] sm:$0xf]
      %v2105 = vld [vmem:[%s2098 + $0x18] sm:$0xf]
      %v2106 = vld [vmem:[%s2098 + $0x1c] sm:$0xf]
      %v2107 = vld [vmem:[%s2098 + $0x20] sm:$0xf]
      %v2108 = vld [vmem:[%s2098 + $0x24] sm:$0xf]
      %v2109 = vld [vmem:[%s2098 + $0x28] sm:$0xf]
      %v2110 = vld [vmem:[%s2098 + $0x2c] sm:$0xf]
      %v2111 = vld [vmem:[%s2098 + $0x30] sm:$0xf]
      %v2112 = vld [vmem:[%s2098 + $0x34] sm:$0xf]
      %v2113 = vld [vmem:[%s2098 + $0x38] sm:$0xf]
      %v2114 = vld [vmem:[%s2098 + $0x3c] sm:$0xf]
      %v2131 = vunpack.c.l.b16 %v2099
      %v2132 = vunpack.c.l.b16 %v2100
      %v2133 = vunpack.c.l.b16 %v2101
      %v2134 = vunpack.c.l.b16 %v2102
      %v2135 = vunpack.c.l.b16 %v2103
      %v2136 = vunpack.c.l.b16 %v2104
      %v2137 = vunpack.c.l.b16 %v2105
      %v2138 = vunpack.c.l.b16 %v2106
      %v2139 = vunpack.c.l.b16 %v2107
      %v2140 = vunpack.c.l.b16 %v2108
      %v2141 = vunpack.c.l.b16 %v2109
      %v2142 = vunpack.c.l.b16 %v2110
      %v2143 = vunpack.c.l.b16 %v2111
      %v2144 = vunpack.c.l.b16 %v2112
      %v2145 = vunpack.c.l.b16 %v2113
      %v2146 = vunpack.c.l.b16 %v2114
      %v2147 = vpack.c.b16 %v2132, %v2131
      %v2148 = vpack.c.b16 %v2134, %v2133
      %v2149 = vpack.c.b16 %v2136, %v2135
      %v2150 = vpack.c.b16 %v2138, %v2137
      %v2151 = vpack.c.b16 %v2140, %v2139
      %v2152 = vpack.c.b16 %v2142, %v2141
      %v2153 = vpack.c.b16 %v2144, %v2143
      %v2154 = vpack.c.b16 %v2146, %v2145
      %2163 = vmatpush.bf16.msra.mxu0 %v2154
      %2164 = vmatpush.bf16.msra.mxu0 %v2153
      %2165 = vmatpush.bf16.msra.mxu0 %v2152
      %2166 = vmatpush.bf16.msra.mxu0 %v2151
      %2167 = vmatpush.bf16.msra.mxu0 %v2150
      %2168 = vmatpush.bf16.msra.mxu0 %v2149
      %2169 = vmatpush.bf16.msra.mxu0 %v2148
      %2170 = vmatpush.bf16.msra.mxu0 %v2147
      %2171 = vmatmul.bf16.gmra.mxu0 %v2090
      %v2172 = vpop.f32.mrf.mxu0
      %v2173 = vadd.f32 0.0, %v2172
      %v2174 = vpop.f32.mrf.mxu0
      %v2175 = vadd.f32 0.0, %v2174
      %2176 = vmatmul.bf16.gmra.mxu0 %v2091
      %v2177 = vpop.f32.mrf.mxu0
      %v2178 = vadd.f32 0.0, %v2177
      %v2179 = vpop.f32.mrf.mxu0
      %v2180 = vadd.f32 0.0, %v2179
      %2181 = vmatmul.bf16.gmra.mxu0 %v2092
      %v2182 = vpop.f32.mrf.mxu0
      %v2183 = vadd.f32 0.0, %v2182
      %v2184 = vpop.f32.mrf.mxu0
      %v2185 = vadd.f32 0.0, %v2184
      %2186 = vmatmul.bf16.gmra.mxu0 %v2093
      %v2187 = vpop.f32.mrf.mxu0
      %v2188 = vadd.f32 0.0, %v2187
      %v2189 = vpop.f32.mrf.mxu0
      %v2190 = vadd.f32 0.0, %v2189
      %2191 = vmatmul.bf16.gmra.mxu0 %v2094
      %v2192 = vpop.f32.mrf.mxu0
      %v2193 = vadd.f32 0.0, %v2192
      %v2194 = vpop.f32.mrf.mxu0
      %v2195 = vadd.f32 0.0, %v2194
      %2196 = vmatmul.bf16.gmra.mxu0 %v2095
      %v2197 = vpop.f32.mrf.mxu0
      %v2198 = vadd.f32 0.0, %v2197
      %v2199 = vpop.f32.mrf.mxu0
      %v2200 = vadd.f32 0.0, %v2199
      %2201 = vmatmul.bf16.gmra.mxu0 %v2096
      %v2202 = vpop.f32.mrf.mxu0
      %v2203 = vadd.f32 0.0, %v2202
      %v2204 = vpop.f32.mrf.mxu0
      %v2205 = vadd.f32 0.0, %v2204
      %2206 = vmatmul.bf16.gmra.mxu0 %v2097
      %v2207 = vpop.f32.mrf.mxu0
      %v2208 = vadd.f32 0.0, %v2207
      %v2209 = vpop.f32.mrf.mxu0
      %v2210 = vadd.f32 0.0, %v2209
      %2211 = vdwg.mxu0
      %v2212 = vsel %vm1208, %v2173, 0.0
      %v2213 = vsel %vm1209, %v2175, 0.0
      %v2214 = vsel %vm1210, %v2178, 0.0
      %v2215 = vsel %vm1211, %v2180, 0.0
      %v2216 = vsel %vm1212, %v2183, 0.0
      %v2217 = vsel %vm1213, %v2185, 0.0
      %v2218 = vsel %vm1214, %v2188, 0.0
      %v2219 = vsel %vm1215, %v2190, 0.0
      %v2220 = vsel %vm1216, %v2193, 0.0
      %v2221 = vsel %vm1217, %v2195, 0.0
      %v2222 = vsel %vm1218, %v2198, 0.0
      %v2223 = vsel %vm1219, %v2200, 0.0
      %v2224 = vsel %vm1220, %v2203, 0.0
      %v2225 = vsel %vm1221, %v2205, 0.0
      %v2226 = vsel %vm1222, %v2208, 0.0
      %v2227 = vsel %vm1223, %v2210, 0.0
      %v2228 = vadd.f32 %v2058, %v2212
      %v2229 = vadd.f32 %v2059, %v2213
      %v2230 = vadd.f32 %v2060, %v2214
      %v2231 = vadd.f32 %v2061, %v2215
      %v2232 = vadd.f32 %v2062, %v2216
      %v2233 = vadd.f32 %v2063, %v2217
      %v2234 = vadd.f32 %v2064, %v2218
      %v2235 = vadd.f32 %v2065, %v2219
      %v2236 = vadd.f32 %v2066, %v2220
      %v2237 = vadd.f32 %v2067, %v2221
      %v2238 = vadd.f32 %v2068, %v2222
      %v2239 = vadd.f32 %v2069, %v2223
      %v2240 = vadd.f32 %v2070, %v2224
      %v2241 = vadd.f32 %v2071, %v2225
      %v2242 = vadd.f32 %v2072, %v2226
      %v2243 = vadd.f32 %v2073, %v2227
      %v2244 = vld [vmem:[%s4] sm:$0x1]
      %v2246 = vperm.slane %v2244, 0
      %v2248 = vadd.f32 %v2228, %v2246
      %v2249 = vadd.f32 %v2229, %v2246
      %v2250 = vadd.f32 %v2230, %v2246
      %v2251 = vadd.f32 %v2231, %v2246
      %v2252 = vadd.f32 %v2232, %v2246
      %v2253 = vadd.f32 %v2233, %v2246
      %v2254 = vadd.f32 %v2234, %v2246
      %v2255 = vadd.f32 %v2235, %v2246
      %v2256 = vadd.f32 %v2236, %v2246
      %v2257 = vadd.f32 %v2237, %v2246
      %v2258 = vadd.f32 %v2238, %v2246
      %v2259 = vadd.f32 %v2239, %v2246
      %v2260 = vadd.f32 %v2240, %v2246
      %v2261 = vadd.f32 %v2241, %v2246
      %v2262 = vadd.f32 %v2242, %v2246
      %v2263 = vadd.f32 %v2243, %v2246
      %v2264 = vsub.f32 0.0, %v2248
      %v2265 = vsub.f32 0.0, %v2249
      %v2266 = vsub.f32 0.0, %v2250
      %v2267 = vsub.f32 0.0, %v2251
      %v2268 = vsub.f32 0.0, %v2252
      %v2269 = vsub.f32 0.0, %v2253
      %v2270 = vsub.f32 0.0, %v2254
      %v2271 = vsub.f32 0.0, %v2255
      %v2272 = vsub.f32 0.0, %v2256
      %v2273 = vsub.f32 0.0, %v2257
      %v2274 = vsub.f32 0.0, %v2258
      %v2275 = vsub.f32 0.0, %v2259
      %v2276 = vsub.f32 0.0, %v2260
      %v2277 = vsub.f32 0.0, %v2261
      %v2278 = vsub.f32 0.0, %v2262
      %v2279 = vsub.f32 0.0, %v2263
      %v2280 = vmul.f32 %v2264, 1.442695
      %v2281 = vpow.pop %v2280
      %v2282 = vmul.f32 %v2265, 1.442695
      %v2283 = vpow.pop %v2282
      %v2284 = vmul.f32 %v2266, 1.442695
      %v2285 = vpow.pop %v2284
      %v2286 = vmul.f32 %v2267, 1.442695
      %v2287 = vpow.pop %v2286
      %v2288 = vmul.f32 %v2268, 1.442695
      %v2289 = vpow.pop %v2288
      %v2290 = vmul.f32 %v2269, 1.442695
      %v2291 = vpow.pop %v2290
      %v2292 = vmul.f32 %v2270, 1.442695
      %v2293 = vpow.pop %v2292
      %v2294 = vmul.f32 %v2271, 1.442695
      %v2295 = vpow.pop %v2294
      %v2296 = vmul.f32 %v2272, 1.442695
      %v2297 = vpow.pop %v2296
      %v2298 = vmul.f32 %v2273, 1.442695
      %v2299 = vpow.pop %v2298
      %v2300 = vmul.f32 %v2274, 1.442695
      %v2301 = vpow.pop %v2300
      %v2302 = vmul.f32 %v2275, 1.442695
      %v2303 = vpow.pop %v2302
      %v2304 = vmul.f32 %v2276, 1.442695
      %v2305 = vpow.pop %v2304
      %v2306 = vmul.f32 %v2277, 1.442695
      %v2307 = vpow.pop %v2306
      %v2308 = vmul.f32 %v2278, 1.442695
      %v2309 = vpow.pop %v2308
      %v2310 = vmul.f32 %v2279, 1.442695
      %v2311 = vpow.pop %v2310
      %v2312 = vadd.f32 %v2281, 1.0
      %v2313 = vadd.f32 %v2283, 1.0
      %v2314 = vadd.f32 %v2285, 1.0
      %v2315 = vadd.f32 %v2287, 1.0
      %v2316 = vadd.f32 %v2289, 1.0
      %v2317 = vadd.f32 %v2291, 1.0
      %v2318 = vadd.f32 %v2293, 1.0
      %v2319 = vadd.f32 %v2295, 1.0
      %v2320 = vadd.f32 %v2297, 1.0
      %v2321 = vadd.f32 %v2299, 1.0
      %v2322 = vadd.f32 %v2301, 1.0
      %v2323 = vadd.f32 %v2303, 1.0
      %v2324 = vadd.f32 %v2305, 1.0
      %v2325 = vadd.f32 %v2307, 1.0
      %v2326 = vadd.f32 %v2309, 1.0
      %v2327 = vadd.f32 %v2311, 1.0
      %v2328 = vrcp.pop %v2312
      %v2329 = vrcp.pop %v2313
      %v2330 = vrcp.pop %v2314
      %v2331 = vrcp.pop %v2315
      %v2332 = vrcp.pop %v2316
      %v2333 = vrcp.pop %v2317
      %v2334 = vrcp.pop %v2318
      %v2335 = vrcp.pop %v2319
      %v2336 = vrcp.pop %v2320
      %v2337 = vrcp.pop %v2321
      %v2338 = vrcp.pop %v2322
      %v2339 = vrcp.pop %v2323
      %v2340 = vrcp.pop %v2324
      %v2341 = vrcp.pop %v2325
      %v2342 = vrcp.pop %v2326
      %v2343 = vrcp.pop %v2327
      %v2344 = vmul.f32 %v2248, %v2328
      %v2345 = vmul.f32 %v2249, %v2329
      %v2346 = vmul.f32 %v2250, %v2330
      %v2347 = vmul.f32 %v2251, %v2331
      %v2348 = vmul.f32 %v2252, %v2332
      %v2349 = vmul.f32 %v2253, %v2333
      %v2350 = vmul.f32 %v2254, %v2334
      %v2351 = vmul.f32 %v2255, %v2335
      %v2352 = vmul.f32 %v2256, %v2336
      %v2353 = vmul.f32 %v2257, %v2337
      %v2354 = vmul.f32 %v2258, %v2338
      %v2355 = vmul.f32 %v2259, %v2339
      %v2356 = vmul.f32 %v2260, %v2340
      %v2357 = vmul.f32 %v2261, %v2341
      %v2358 = vmul.f32 %v2262, %v2342
      %v2359 = vmul.f32 %v2263, %v2343
      %2360 = vst [vmem:[%s390] sm:$0xff] %v2344
      %2361 = vst [vmem:[%s390 + $0x8] sm:$0xff] %v2345
      %2362 = vst [vmem:[%s390 + $0x10] sm:$0xff] %v2346
      %2363 = vst [vmem:[%s390 + $0x18] sm:$0xff] %v2347
      %2364 = vst [vmem:[%s390 + $0x20] sm:$0xff] %v2348
      %2365 = vst [vmem:[%s390 + $0x28] sm:$0xff] %v2349
      %2366 = vst [vmem:[%s390 + $0x30] sm:$0xff] %v2350
      %2367 = vst [vmem:[%s390 + $0x38] sm:$0xff] %v2351
      %2368 = vst [vmem:[%s390 + $0x40] sm:$0xff] %v2352
      %2369 = vst [vmem:[%s390 + $0x48] sm:$0xff] %v2353
      %2370 = vst [vmem:[%s390 + $0x50] sm:$0xff] %v2354
      %2371 = vst [vmem:[%s390 + $0x58] sm:$0xff] %v2355
      %2372 = vst [vmem:[%s390 + $0x60] sm:$0xff] %v2356
      %2373 = vst [vmem:[%s390 + $0x68] sm:$0xff] %v2357
      %2374 = vst [vmem:[%s390 + $0x70] sm:$0xff] %v2358
      %2375 = vst [vmem:[%s390 + $0x78] sm:$0xff] %v2359
      %s2376 = smul.u32 16, %s21
      %p2377 = scmp.lt.s32.totalorder %s20, 1
      %s2378 = scalar_select %p2377, %s20, 1
      %p2379 = scmp.lt.s32.totalorder %s2376, 31
      %s2380 = scalar_select %p2379, %s2376, 31
      %s2381 = smul.addr %s2378, 32
      %s2382 = sadd.s32 %s2380, %s2381
      %s2383 = smul.addr %s2382, 8
      %s2384 = scalar_lea.vmem %s5, %s2383
      // Predicated region
      $region57: #{conv2_forward_nchw.1} parent=39 // pred_check
        %p2385 = pneg %p190
      $region58: #{conv2_forward_nchw.1} parent=39 // pred_check_branch
        %2387 = sbr.rel (%p2385) target = $region60
      $region59: #{conv2_forward_nchw.1} parent=39 // pred_region
        %s2388 = smul.u32 16, %s21
      $region60: #{conv2_forward_nchw.1} parent=39 // pred_fallthru
        _
    $region40: #{conv2_forward_nchw.1} parent=5 // pred_fallthru
      _
    %p2389 = scmp.le.s32.totalorder 2, %s11
    // Predicated region
    $region61: #{conv2_forward_nchw.1} parent=5 // pred_check
      %p2390 = pneg %p2389
    $region62: #{conv2_forward_nchw.1} parent=5 // pred_check_branch
      %2392 = sbr.rel (%p2390) target = $region64
    $region63: #{conv2_forward_nchw.1} parent=5 // pred_region
      %s2393 = ssub.s32 %s11, 2
      // Predicated region
      $region65: #{conv2_forward_nchw.1} parent=63 // pred_check
        %p2394 = pneg %p196
      $region66: #{conv2_forward_nchw.1} parent=63 // pred_check_branch
        %2396 = sbr.rel (%p2394) target = $region68
      $region67: #{conv2_forward_nchw.1} parent=63 // pred_region
        %s2397 = smul.u32 16, %s23
        %p2398 = scmp.lt.s32.totalorder %s22, 1
        %s2399 = scalar_select %p2398, %s22, 1
        %p2400 = scmp.lt.s32.totalorder %s2397, 31
        %s2401 = scalar_select %p2400, %s2397, 31
        %s2402 = smul.addr %s2399, 32
        %s2403 = sadd.s32 %s2401, %s2402
        %s2404 = smul.addr %s2403, 8
        %s2405 = scalar_lea.vmem %s5, %s2404
      $region68: #{conv2_forward_nchw.1} parent=63 // pred_fallthru
        _
    $region64: #{conv2_forward_nchw.1} parent=5 // pred_fallthru
      _
  $region6: #{conv2_forward_nchw.1} parent=0 // loop_footer
    %s15 = sadd.s32 1, %s11
  $region7: #{conv2_forward_nchw.1} parent=0 // loop_footer_branch
    %10 = sbr.rel target = $region3
  $region8: #{conv2_forward_nchw.1} parent=0 // loop_exit
    _

</llo_original>
